<compile_context>
chip_gen: v6e
topology: v6e:2x2x1
jax: 0.10.0
libtpu: 0.0.40
codegen_flags: <defaults>
</compile_context>

<pallas_src>
import functools
import math

import jax
import jax.numpy as jnp
from jax.experimental import pallas as pl
from jax.experimental.pallas import tpu as pltpu

LANE = 128


def _round_up(x, m):
    return ((x + m - 1) // m) * m


def _pad_axis(a, axis, target):
    pad = target - a.shape[axis]
    if pad == 0:
        return a
    widths = [(0, 0)] * a.ndim
    widths[axis] = (0, pad)
    return jnp.pad(a, widths)


def _tpu_tiling():
    """Generation-specific (row_tile, scoped_vmem_limit_bytes).

    v5e/v6e: 128 MiB physical VMEM -> tm=512, 96 MiB scoped limit.
    v7x / unknown: 64 MiB physical -> tm=256, 56 MiB (headroom for output
    double-buffers, internal scratch and semaphores).
    """
    tm, vmem_limit = 256, 56 * 1024 * 1024
    try:
        kind = jax.devices()[0].device_kind.lower()
    except Exception:  # pragma: no cover - defensive
        kind = ""
    if "v5" in kind or "v6" in kind:
        tm, vmem_limit = 512, 96 * 1024 * 1024
    return tm, vmem_limit


def _choose_tm(m_pad, tm_target):
    """Largest row tile <= tm_target that divides m_pad (m_pad % 128 == 0)."""
    tm = min(tm_target, m_pad)
    while m_pad % tm != 0:
        tm //= 2
    return tm


# ----------------------------------------------------------------------------
# Kernel 1: feature transform   support = maybe_relu(x) @ W      (bf16 out)
# ----------------------------------------------------------------------------
def _feature_kernel(x_ref, w_ref, o_ref, *, relu_in):
    x = x_ref[...]
    if relu_in:                              # fuses F.relu(embedding(x)) into gc1
        x = jnp.maximum(x, 0)
    s = jnp.dot(x, w_ref[...], preferred_element_type=jnp.float32)
    o_ref[...] = s.astype(o_ref.dtype)


def feature_transform(x, w, *, relu_in):
    """(m_pad, K) @ (K, f_pad) -> (m_pad, f_pad) bf16, row-parallel."""
    m_pad, k = x.shape
    kw, f_pad = w.shape
    assert kw == k and m_pad % LANE == 0 and f_pad % LANE == 0
    tm_target, _ = _tpu_tiling()
    tm = _choose_tm(m_pad, tm_target)

    kernel = functools.partial(_feature_kernel, relu_in=relu_in)
    return pl.pallas_call(
        kernel,
        out_shape=jax.ShapeDtypeStruct((m_pad, f_pad), jnp.bfloat16),
        grid_spec=pltpu.PrefetchScalarGridSpec(
            num_scalar_prefetch=0,
            grid=(m_pad // tm,),
            in_specs=[
                pl.BlockSpec((tm, k), lambda i: (i, 0)),      # x row tile
                pl.BlockSpec((k, f_pad), lambda i: (0, 0)),   # W (resident)
            ],
            out_specs=pl.BlockSpec((tm, f_pad), lambda i: (i, 0)),
        ),
        compiler_params=pltpu.CompilerParams(
            dimension_semantics=("parallel",),
        ),
    )(x.astype(jnp.bfloat16), w.astype(jnp.bfloat16))


# ----------------------------------------------------------------------------
# Kernel 2: neighborhood aggregation
#   out_tile = maybe_relu( inv_deg_tile * (adj01_tile @ support) + bias )
# Exact adjacency: 0/1 int8 storage, per-row 1/deg applied on the f32 accum.
# ----------------------------------------------------------------------------
def _aggregate_kernel(support_ref, b_ref, scale_ref, adj_ref, o_ref, *, relu_out):
    a = adj_ref[...].astype(jnp.bfloat16)            # 0/1 -> exact in bf16
    y = jnp.dot(a, support_ref[...], preferred_element_type=jnp.float32)
    y = y * scale_ref[...] + b_ref[...]              # (tm,1) and (1,f_pad) broadcasts
    if relu_out:                                     # fuses F.relu(gc1(...))
        y = jnp.maximum(y, 0.0)
    o_ref[...] = y.astype(o_ref.dtype)


def aggregate(support, bias, row_scale, adj_mask_i8, *, relu_out, out_dtype):
    """diag(row_scale) @ adj01 @ support + bias, one lane-dense row tile/step.

    support     : (m_pad, f_pad) bf16   resident in VMEM for every row tile
    bias        : (f_pad,)       f32
    row_scale   : (m_pad, 1)     f32    per-row 1/deg
    adj_mask_i8 : (m_pad, m_pad) int8   0/1 adjacency mask (dominant HBM read)
    """
    m_pad, f_pad = support.shape
    assert adj_mask_i8.shape == (m_pad, m_pad)
    assert row_scale.shape == (m_pad, 1)
    tm_target, vmem_limit = _tpu_tiling()
    tm = _choose_tm(m_pad, tm_target)

    kernel = functools.partial(_aggregate_kernel, relu_out=relu_out)
    return pl.pallas_call(
        kernel,
        out_shape=jax.ShapeDtypeStruct((m_pad, f_pad), out_dtype),
        grid_spec=pltpu.PrefetchScalarGridSpec(
            num_scalar_prefetch=0,
            grid=(m_pad // tm,),
            in_specs=[
                pl.BlockSpec((m_pad, f_pad), lambda i: (0, 0)),  # support (resident)
                pl.BlockSpec((1, f_pad), lambda i: (0, 0)),      # bias    (resident)
                pl.BlockSpec((tm, 1), lambda i: (i, 0)),         # per-row 1/deg
                pl.BlockSpec((tm, m_pad), lambda i: (i, 0)),     # int8 adj row tile
            ],
            out_specs=pl.BlockSpec((tm, f_pad), lambda i: (i, 0)),
        ),
        compiler_params=pltpu.CompilerParams(
            # No cross-step scratch dependency -> safe to shard rows across
            # v7x's two TensorCores; no-op on single-TC v5e/v6e.
            dimension_semantics=("parallel",),
            vmem_limit_bytes=vmem_limit,
        ),
    )(
        support.astype(jnp.bfloat16),
        bias.reshape(1, f_pad).astype(jnp.float32),
        row_scale.astype(jnp.float32),
        adj_mask_i8,
    )


# ----------------------------------------------------------------------------
# One-time adjacency preprocessing (outside the per-call forward)
# ----------------------------------------------------------------------------
def preprocess_adjacency(adj, *, validate=True):
    """Pad to a multiple of 128 and decompose adj == diag(scale) @ mask01.

    Assumes a row-normalized adjacency: every nonzero in row i has the same
    value (e.g. 1/deg_i), so the decomposition is numerically exact.
    """
    n = adj.shape[0]
    m_pad = _round_up(n, LANE)

    mask = (adj != 0)
    scale = jnp.max(adj, axis=1)                       # common nonzero value per row
    if validate:
        recon = mask.astype(adj.dtype) * scale[:, None]
        if not bool(jnp.allclose(recon, adj, atol=1e-6, rtol=1e-6)):
            raise ValueError(
                "preprocess_adjacency: adjacency is not row-uniform "
                "(expected a row-normalized adjacency with equal nonzeros per row)."
            )

    mask_p = _pad_axis(_pad_axis(mask.astype(jnp.int8), 0, m_pad), 1, m_pad)
    scale_p = _pad_axis(scale.astype(jnp.float32), 0, m_pad).reshape(m_pad, 1)
    return mask_p, scale_p


# ----------------------------------------------------------------------------
# GCN forward (eval mode: dropout is identity, matching training=False)
# ----------------------------------------------------------------------------
def gcn_forward(params, x_idx, adj_mask_i8, adj_row_scale, *, n_class):
    n_nodes = x_idx.shape[0]
    m_pad = adj_mask_i8.shape[0]

    # Embedding lookup (gather) stays in plain-JAX glue; its ReLU is fused into
    # the first feature-transform kernel (relu commutes with the reshape).
    emb = jnp.take(params["embedding"], x_idx, axis=0)         # (N, L, D)
    x = emb.reshape(n_nodes, -1)                               # (N, in_ch)
    x_p = _pad_axis(x, 0, m_pad)                               # padded rows are zero

    n_hid = params["w1"].shape[1]
    hid_pad = _round_up(n_hid, LANE)                           # keep at 128 (no MXU-fill padding)
    cls_pad = _round_up(n_class, LANE)

    w1 = _pad_axis(params["w1"], 1, hid_pad)
    b1 = _pad_axis(params["b1"], 0, hid_pad)
    w2 = _pad_axis(_pad_axis(params["w2"], 0, hid_pad), 1, cls_pad)
    b2 = _pad_axis(params["b2"], 0, cls_pad)

    # gc1: relu( adj @ (relu(x) @ W1) + b1 )    -> bf16 h flows straight into gc2
    s1 = feature_transform(x_p, w1, relu_in=True)
    # NOTE: padded rows of h equal relu(b1); harmless because adj's padded
    # columns are zero and the final slice drops padded rows.
    h = aggregate(s1, b1, adj_row_scale, adj_mask_i8,
                  relu_out=True, out_dtype=jnp.bfloat16)

    # F.dropout(..., training=self.training): eval mode -> identity.

    # gc2: adj @ (h @ W2) + b2
    s2 = feature_transform(h, w2, relu_in=False)
    out = aggregate(s2, b2, adj_row_scale, adj_mask_i8,
                    relu_out=False, out_dtype=jnp.float32)

    return out[:n_nodes, :n_class]


# ----------------------------------------------------------------------------
# Pure-JAX reference (same math, dense f32) for a correctness check
# ----------------------------------------------------------------------------
def gcn_reference(params, x_idx, adj):
    emb = jnp.take(params["embedding"], x_idx, axis=0)
    x = jnp.maximum(emb, 0.0).reshape(x_idx.shape[0], -1)
    s1 = x @ params["w1"]
    h = jnp.maximum(adj @ s1 + params["b1"], 0.0)
    s2 = h @ params["w2"]
    return adj @ s2 + params["b2"]


# ----------------------------------------------------------------------------
# Deterministic parameter init (mirrors the module's __init__ shapes)
# ----------------------------------------------------------------------------
def init_params(key, in_ch, n_class, n_hid, embedding_num, embedding_dim):
    k_emb, k_w1, k_b1, k_w2, k_b2 = jax.random.split(key, 5)

    # nn.Embedding(embedding_num + 1, embedding_dim, padding_idx=0): N(0,1), row 0 zeroed
    emb = jax.random.normal(k_emb, (embedding_num + 1, embedding_dim), jnp.float32)
    emb = emb.at[0].set(0.0)

    # GraphConvolution reset_parameters: uniform(-stdv, stdv), stdv = 1/sqrt(out_features)
    stdv1 = 1.0 / math.sqrt(n_hid)
    w1 = jax.random.uniform(k_w1, (in_ch, n_hid), jnp.float32, -stdv1, stdv1)
    b1 = jax.random.uniform(k_b1, (n_hid,), jnp.float32, -stdv1, stdv1)

    stdv2 = 1.0 / math.sqrt(n_class)
    w2 = jax.random.uniform(k_w2, (n_hid, n_class), jnp.float32, -stdv2, stdv2)
    b2 = jax.random.uniform(k_b2, (n_class,), jnp.float32, -stdv2, stdv2)

    return {"embedding": emb, "w1": w1, "b1": b1, "w2": w2, "b2": b2}


if __name__ == "__main__":
    # Small shapes consistent with the forward pass (real model: 15279 nodes).
    N_NODES = 64          # stand-in for the hard-coded 15279 (padded to 128 here)
    SEQ_LEN = 4           # tokens per node fed to the embedding
    EMBEDDING_NUM = 50
    EMBEDDING_DIM = 8
    IN_CH = SEQ_LEN * EMBEDDING_DIM   # 32, matches reshape(N, -1)
    N_HID = 32
    N_CLASS = 8
    DROPOUT = 0.5         # unused in eval mode

    key = jax.random.PRNGKey(0)
    k_params, k_x, k_adj = jax.random.split(key, 3)

    params = init_params(k_params, IN_CH, N_CLASS, N_HID, EMBEDDING_NUM, EMBEDDING_DIM)

    # Integer token indices (0 is the padding index).
    x_idx = jax.random.randint(k_x, (N_NODES, SEQ_LEN), 0, EMBEDDING_NUM + 1, jnp.int32)

    # Row-normalized adjacency with self-loops (typical GCN input):
    # every nonzero in row i equals 1/deg_i.
    a = (jax.random.uniform(k_adj, (N_NODES, N_NODES)) < 0.1).astype(jnp.float32)
    a = a + a.T + jnp.eye(N_NODES, dtype=jnp.float32)
    a = jnp.minimum(a, 1.0)
    adj = a / jnp.sum(a, axis=1, keepdims=True)

    # Pad + decompose the adjacency ONCE, outside the jitted per-call forward.
    adj_mask_i8, adj_row_scale = preprocess_adjacency(adj)
    adj_mask_i8 = jax.block_until_ready(adj_mask_i8)
    adj_row_scale = jax.block_until_ready(adj_row_scale)

    fwd = jax.jit(functools.partial(gcn_forward, n_class=N_CLASS))
    out = jax.block_until_ready(fwd(params, x_idx, adj_mask_i8, adj_row_scale))

    assert out.shape == (N_NODES, N_CLASS)
    assert bool(jnp.all(jnp.isfinite(out)))

    # Adjacency path is exact (0/1 int8 + f32 per-row scale); remaining error
    # comes only from bf16 feature/weight/support storage.
    ref = gcn_reference(params, x_idx, adj)
    max_err = float(jnp.max(jnp.abs(out - ref)))
    assert bool(jnp.allclose(out, ref, atol=5e-2, rtol=5e-2)), max_err

    print("KERNEL_OK")
</pallas_src>

<mosaic_0001>
module attributes {stable_mosaic.version = 11 : i64} {
  func.func @_feature_kernel(%arg0: i32, %arg1: memref<128x32xbf16, #tpu.memory_space<vmem>>, %arg2: memref<32x128xbf16, #tpu.memory_space<vmem>>, %arg3: memref<128x128xbf16, #tpu.memory_space<vmem>>) attributes {dimension_semantics = [#tpu.dimension_semantics<parallel>], iteration_bounds = array<i64: 1>, scalar_prefetch = 0 : i64, scratch_operands = 0 : i64, tpu.core_type = #tpu.core_type<tc>, window_params = [{transform_indices = @transform_0, window_bounds = array<i64: 128, 32>}, {pipeline_mode = #tpu.pipeline_mode<synchronous>, transform_indices = @transform_1, window_bounds = array<i64: 32, 128>}, {transform_indices = @transform_2, window_bounds = array<i64: 128, 128>}]} {
    %c0 = arith.constant 0 : index
    %c0_0 = arith.constant 0 : index
    %0 = vector.load %arg1[%c0, %c0_0] : memref<128x32xbf16, #tpu.memory_space<vmem>>, vector<128x32xbf16>
    %cst = arith.constant 0.000000e+00 : bf16
    %1 = vector.broadcast %cst : bf16 to vector<128x32xbf16>
    %2 = arith.maximumf %0, %1 : vector<128x32xbf16>
    %c0_1 = arith.constant 0 : index
    %c0_2 = arith.constant 0 : index
    %3 = vector.load %arg2[%c0_1, %c0_2] : memref<32x128xbf16, #tpu.memory_space<vmem>>, vector<32x128xbf16>
    %cst_3 = arith.constant dense<0.000000e+00> : vector<128x128xf32>
    %4 = tpu.matmul %2, %3, %cst_3 {dimension_numbers = #tpu.dot_dimension_numbers<[1], [0], [0], [1], [0, 0, 1, 1], [], []>} : vector<128x32xbf16>, vector<32x128xbf16>, vector<128x128xf32> -> vector<128x128xf32>
    %5 = arith.truncf %4 : vector<128x128xf32> to vector<128x128xbf16>
    %c0_4 = arith.constant 0 : index
    %c0_5 = arith.constant 0 : index
    %6 = vector.load %arg3[%c0_4, %c0_5] : memref<128x128xbf16, #tpu.memory_space<vmem>>, vector<128x128xbf16>
    tpu.vector_store %arg3[%c0_4, %c0_5], %5 {strides = array<i32>} : memref<128x128xbf16, #tpu.memory_space<vmem>>, vector<128x128xbf16>,
    return
  }
  func.func @transform_0(%arg0: i32) -> (i32, i32) {
    %c0_i32 = arith.constant 0 : i32
    %c0_i32_0 = arith.constant 0 : i32
    return %arg0, %c0_i32 : i32, i32
  }
  func.func @transform_1(%arg0: i32) -> (i32, i32) {
    %c0_i32 = arith.constant 0 : i32
    %c0_i32_0 = arith.constant 0 : i32
    %c0_i32_1 = arith.constant 0 : i32
    return %c0_i32, %c0_i32_0 : i32, i32
  }
  func.func @transform_2(%arg0: i32) -> (i32, i32) {
    %c0_i32 = arith.constant 0 : i32
    %c0_i32_0 = arith.constant 0 : i32
    return %arg0, %c0_i32 : i32, i32
  }
}

module attributes {stable_mosaic.version = 11 : i64} {
  func.func @_aggregate_kernel(%arg0: i32, %arg1: memref<128x128xbf16, #tpu.memory_space<vmem>>, %arg2: memref<1x128xf32, #tpu.memory_space<vmem>>, %arg3: memref<128x1xf32, #tpu.memory_space<vmem>>, %arg4: memref<128x128xi8, #tpu.memory_space<vmem>>, %arg5: memref<128x128xbf16, #tpu.memory_space<vmem>>) attributes {dimension_semantics = [#tpu.dimension_semantics<parallel>], iteration_bounds = array<i64: 1>, scalar_prefetch = 0 : i64, scratch_operands = 0 : i64, tpu.core_type = #tpu.core_type<tc>, window_params = [{pipeline_mode = #tpu.pipeline_mode<synchronous>, transform_indices = @transform_0, window_bounds = array<i64: 128, 128>}, {pipeline_mode = #tpu.pipeline_mode<synchronous>, transform_indices = @transform_1, window_bounds = array<i64: 1, 128>}, {transform_indices = @transform_2, window_bounds = array<i64: 128, 1>}, {transform_indices = @transform_3, window_bounds = array<i64: 128, 128>}, {transform_indices = @transform_4, window_bounds = array<i64: 128, 128>}]} {
    %c0 = arith.constant 0 : index
    %c0_0 = arith.constant 0 : index
    %0 = vector.load %arg4[%c0, %c0_0] : memref<128x128xi8, #tpu.memory_space<vmem>>, vector<128x128xi8>
    %1 = arith.sitofp %0 : vector<128x128xi8> to vector<128x128xbf16>
    %c0_1 = arith.constant 0 : index
    %c0_2 = arith.constant 0 : index
    %2 = vector.load %arg1[%c0_1, %c0_2] : memref<128x128xbf16, #tpu.memory_space<vmem>>, vector<128x128xbf16>
    %cst = arith.constant dense<0.000000e+00> : vector<128x128xf32>
    %3 = tpu.matmul %1, %2, %cst {dimension_numbers = #tpu.dot_dimension_numbers<[1], [0], [0], [1], [0, 0, 1, 1], [], []>} : vector<128x128xbf16>, vector<128x128xbf16>, vector<128x128xf32> -> vector<128x128xf32>
    %c0_3 = arith.constant 0 : index
    %c0_4 = arith.constant 0 : index
    %4 = vector.load %arg3[%c0_3, %c0_4] : memref<128x1xf32, #tpu.memory_space<vmem>>, vector<128x1xf32>
    %5 = vector.broadcast %4 : vector<128x1xf32> to vector<128x128xf32>
    %6 = arith.mulf %3, %5 : vector<128x128xf32>
    %c0_5 = arith.constant 0 : index
    %c0_6 = arith.constant 0 : index
    %7 = vector.load %arg2[%c0_5, %c0_6] : memref<1x128xf32, #tpu.memory_space<vmem>>, vector<1x128xf32>
    %8 = vector.broadcast %7 : vector<1x128xf32> to vector<128x128xf32>
    %9 = arith.addf %6, %8 : vector<128x128xf32>
    %cst_7 = arith.constant 0.000000e+00 : f32
    %10 = vector.broadcast %cst_7 : f32 to vector<128x128xf32>
    %11 = arith.maximumf %9, %10 : vector<128x128xf32>
    %12 = arith.truncf %11 : vector<128x128xf32> to vector<128x128xbf16>
    %c0_8 = arith.constant 0 : index
    %c0_9 = arith.constant 0 : index
    %13 = vector.load %arg5[%c0_8, %c0_9] : memref<128x128xbf16, #tpu.memory_space<vmem>>, vector<128x128xbf16>
    tpu.vector_store %arg5[%c0_8, %c0_9], %12 {strides = array<i32>} : memref<128x128xbf16, #tpu.memory_space<vmem>>, vector<128x128xbf16>,
    return
  }
  func.func @transform_0(%arg0: i32) -> (i32, i32) {
    %c0_i32 = arith.constant 0 : i32
    %c0_i32_0 = arith.constant 0 : i32
    %c0_i32_1 = arith.constant 0 : i32
    return %c0_i32, %c0_i32_0 : i32, i32
  }
  func.func @transform_1(%arg0: i32) -> (i32, i32) {
    %c0_i32 = arith.constant 0 : i32
    %c0_i32_0 = arith.constant 0 : i32
    %c0_i32_1 = arith.constant 0 : i32
    return %c0_i32, %c0_i32_0 : i32, i32
  }
  func.func @transform_2(%arg0: i32) -> (i32, i32) {
    %c0_i32 = arith.constant 0 : i32
    %c0_i32_0 = arith.constant 0 : i32
    return %arg0, %c0_i32 : i32, i32
  }
  func.func @transform_3(%arg0: i32) -> (i32, i32) {
    %c0_i32 = arith.constant 0 : i32
    %c0_i32_0 = arith.constant 0 : i32
    return %arg0, %c0_i32 : i32, i32
  }
  func.func @transform_4(%arg0: i32) -> (i32, i32) {
    %c0_i32 = arith.constant 0 : i32
    %c0_i32_0 = arith.constant 0 : i32
    return %arg0, %c0_i32 : i32, i32
  }
}

module attributes {stable_mosaic.version = 11 : i64} {
  func.func @_feature_kernel(%arg0: i32, %arg1: memref<128x128xbf16, #tpu.memory_space<vmem>>, %arg2: memref<128x128xbf16, #tpu.memory_space<vmem>>, %arg3: memref<128x128xbf16, #tpu.memory_space<vmem>>) attributes {dimension_semantics = [#tpu.dimension_semantics<parallel>], iteration_bounds = array<i64: 1>, scalar_prefetch = 0 : i64, scratch_operands = 0 : i64, tpu.core_type = #tpu.core_type<tc>, window_params = [{transform_indices = @transform_0, window_bounds = array<i64: 128, 128>}, {pipeline_mode = #tpu.pipeline_mode<synchronous>, transform_indices = @transform_1, window_bounds = array<i64: 128, 128>}, {transform_indices = @transform_2, window_bounds = array<i64: 128, 128>}]} {
    %c0 = arith.constant 0 : index
    %c0_0 = arith.constant 0 : index
    %0 = vector.load %arg1[%c0, %c0_0] : memref<128x128xbf16, #tpu.memory_space<vmem>>, vector<128x128xbf16>
    %c0_1 = arith.constant 0 : index
    %c0_2 = arith.constant 0 : index
    %1 = vector.load %arg2[%c0_1, %c0_2] : memref<128x128xbf16, #tpu.memory_space<vmem>>, vector<128x128xbf16>
    %cst = arith.constant dense<0.000000e+00> : vector<128x128xf32>
    %2 = tpu.matmul %0, %1, %cst {dimension_numbers = #tpu.dot_dimension_numbers<[1], [0], [0], [1], [0, 0, 1, 1], [], []>} : vector<128x128xbf16>, vector<128x128xbf16>, vector<128x128xf32> -> vector<128x128xf32>
    %3 = arith.truncf %2 : vector<128x128xf32> to vector<128x128xbf16>
    %c0_3 = arith.constant 0 : index
    %c0_4 = arith.constant 0 : index
    %4 = vector.load %arg3[%c0_3, %c0_4] : memref<128x128xbf16, #tpu.memory_space<vmem>>, vector<128x128xbf16>
    tpu.vector_store %arg3[%c0_3, %c0_4], %3 {strides = array<i32>} : memref<128x128xbf16, #tpu.memory_space<vmem>>, vector<128x128xbf16>,
    return
  }
  func.func @transform_0(%arg0: i32) -> (i32, i32) {
    %c0_i32 = arith.constant 0 : i32
    %c0_i32_0 = arith.constant 0 : i32
    return %arg0, %c0_i32 : i32, i32
  }
  func.func @transform_1(%arg0: i32) -> (i32, i32) {
    %c0_i32 = arith.constant 0 : i32
    %c0_i32_0 = arith.constant 0 : i32
    %c0_i32_1 = arith.constant 0 : i32
    return %c0_i32, %c0_i32_0 : i32, i32
  }
  func.func @transform_2(%arg0: i32) -> (i32, i32) {
    %c0_i32 = arith.constant 0 : i32
    %c0_i32_0 = arith.constant 0 : i32
    return %arg0, %c0_i32 : i32, i32
  }
}

module attributes {stable_mosaic.version = 11 : i64} {
  func.func @_aggregate_kernel(%arg0: i32, %arg1: memref<128x128xbf16, #tpu.memory_space<vmem>>, %arg2: memref<1x128xf32, #tpu.memory_space<vmem>>, %arg3: memref<128x1xf32, #tpu.memory_space<vmem>>, %arg4: memref<128x128xi8, #tpu.memory_space<vmem>>, %arg5: memref<128x128xf32, #tpu.memory_space<vmem>>) attributes {dimension_semantics = [#tpu.dimension_semantics<parallel>], iteration_bounds = array<i64: 1>, scalar_prefetch = 0 : i64, scratch_operands = 0 : i64, tpu.core_type = #tpu.core_type<tc>, window_params = [{pipeline_mode = #tpu.pipeline_mode<synchronous>, transform_indices = @transform_0, window_bounds = array<i64: 128, 128>}, {pipeline_mode = #tpu.pipeline_mode<synchronous>, transform_indices = @transform_1, window_bounds = array<i64: 1, 128>}, {transform_indices = @transform_2, window_bounds = array<i64: 128, 1>}, {transform_indices = @transform_3, window_bounds = array<i64: 128, 128>}, {transform_indices = @transform_4, window_bounds = array<i64: 128, 128>}]} {
    %c0 = arith.constant 0 : index
    %c0_0 = arith.constant 0 : index
    %0 = vector.load %arg4[%c0, %c0_0] : memref<128x128xi8, #tpu.memory_space<vmem>>, vector<128x128xi8>
    %1 = arith.sitofp %0 : vector<128x128xi8> to vector<128x128xbf16>
    %c0_1 = arith.constant 0 : index
    %c0_2 = arith.constant 0 : index
    %2 = vector.load %arg1[%c0_1, %c0_2] : memref<128x128xbf16, #tpu.memory_space<vmem>>, vector<128x128xbf16>
    %cst = arith.constant dense<0.000000e+00> : vector<128x128xf32>
    %3 = tpu.matmul %1, %2, %cst {dimension_numbers = #tpu.dot_dimension_numbers<[1], [0], [0], [1], [0, 0, 1, 1], [], []>} : vector<128x128xbf16>, vector<128x128xbf16>, vector<128x128xf32> -> vector<128x128xf32>
    %c0_3 = arith.constant 0 : index
    %c0_4 = arith.constant 0 : index
    %4 = vector.load %arg3[%c0_3, %c0_4] : memref<128x1xf32, #tpu.memory_space<vmem>>, vector<128x1xf32>
    %5 = vector.broadcast %4 : vector<128x1xf32> to vector<128x128xf32>
    %6 = arith.mulf %3, %5 : vector<128x128xf32>
    %c0_5 = arith.constant 0 : index
    %c0_6 = arith.constant 0 : index
    %7 = vector.load %arg2[%c0_5, %c0_6] : memref<1x128xf32, #tpu.memory_space<vmem>>, vector<1x128xf32>
    %8 = vector.broadcast %7 : vector<1x128xf32> to vector<128x128xf32>
    %9 = arith.addf %6, %8 : vector<128x128xf32>
    %c0_7 = arith.constant 0 : index
    %c0_8 = arith.constant 0 : index
    %10 = vector.load %arg5[%c0_7, %c0_8] : memref<128x128xf32, #tpu.memory_space<vmem>>, vector<128x128xf32>
    tpu.vector_store %arg5[%c0_7, %c0_8], %9 {strides = array<i32>} : memref<128x128xf32, #tpu.memory_space<vmem>>, vector<128x128xf32>,
    return
  }
  func.func @transform_0(%arg0: i32) -> (i32, i32) {
    %c0_i32 = arith.constant 0 : i32
    %c0_i32_0 = arith.constant 0 : i32
    %c0_i32_1 = arith.constant 0 : i32
    return %c0_i32, %c0_i32_0 : i32, i32
  }
  func.func @transform_1(%arg0: i32) -> (i32, i32) {
    %c0_i32 = arith.constant 0 : i32
    %c0_i32_0 = arith.constant 0 : i32
    %c0_i32_1 = arith.constant 0 : i32
    return %c0_i32, %c0_i32_0 : i32, i32
  }
  func.func @transform_2(%arg0: i32) -> (i32, i32) {
    %c0_i32 = arith.constant 0 : i32
    %c0_i32_0 = arith.constant 0 : i32
    return %arg0, %c0_i32 : i32, i32
  }
  func.func @transform_3(%arg0: i32) -> (i32, i32) {
    %c0_i32 = arith.constant 0 : i32
    %c0_i32_0 = arith.constant 0 : i32
    return %arg0, %c0_i32 : i32, i32
  }
  func.func @transform_4(%arg0: i32) -> (i32, i32) {
    %c0_i32 = arith.constant 0 : i32
    %c0_i32_0 = arith.constant 0 : i32
    return %arg0, %c0_i32 : i32, i32
  }
}

</mosaic_0001>

<llo_original>
// kernel: gcn_forward.4
$region0: #{gcn_forward.4}
  #allocation0 [shape = 'u32[]', space=smem, size = 0x4, offset = 0x4, fixed_abs, tag = 'smem constant byte address 0x4 - core index']
  #allocation1 [shape = 'u32[144,128]{1,0:T(1,128)}', space=vmem, size = 0x12000, scoped, tag = 'internal scratch']
  %s0 = inlined_call_operand.vmem [shape: bf16[128,32], index: 0, kind: input, shape index: {}]
  %s1 = inlined_call_operand.vmem [shape: bf16[32,128], index: 1, kind: input, shape index: {}]
  %s2 = inlined_call_operand.vmem [shape: bf16[128,128], index: 2, kind: output, shape index: {}]
  %s3 = sld [smem:[#allocation0]]
  $region18: #{gcn_forward.4} parent=0
    _
  %s5 = ssub.s32 1, %s3
  %s6 = scalar_select 0, %s5, %s3
  // Predicated region
  $region2: #{gcn_forward.4} parent=0 // pred_check
    _
  $region3: #{gcn_forward.4} parent=0 // pred_check_branch
    %8 = sbr.rel (0) target = $region5
  $region4: #{gcn_forward.4} parent=0 // pred_region
    _
  $region5: #{gcn_forward.4} parent=0 // pred_fallthru
    _
  // Predicated region
  $region6: #{gcn_forward.4} parent=0 // pred_check
    _
  $region7: #{gcn_forward.4} parent=0 // pred_check_branch
    %10 = sbr.rel (0) target = $region9
  $region8: #{gcn_forward.4} parent=0 // pred_region
    _
  $region9: #{gcn_forward.4} parent=0 // pred_fallthru
    _
  %v12 = vld [vmem:[%s0] sm:$0xf]
  %v13 = vld [vmem:[%s0 + $0x4] sm:$0xf]
  %v14 = vld [vmem:[%s0 + $0x8] sm:$0xf]
  %v15 = vld [vmem:[%s0 + $0xc] sm:$0xf]
  %v16 = vld [vmem:[%s0 + $0x10] sm:$0xf]
  %v17 = vld [vmem:[%s0 + $0x14] sm:$0xf]
  %v18 = vld [vmem:[%s0 + $0x18] sm:$0xf]
  %v19 = vld [vmem:[%s0 + $0x1c] sm:$0xf]
  %v20 = vld [vmem:[%s0 + $0x20] sm:$0xf]
  %v21 = vld [vmem:[%s0 + $0x24] sm:$0xf]
  %v22 = vld [vmem:[%s0 + $0x28] sm:$0xf]
  %v23 = vld [vmem:[%s0 + $0x2c] sm:$0xf]
  %v24 = vld [vmem:[%s0 + $0x30] sm:$0xf]
  %v25 = vld [vmem:[%s0 + $0x34] sm:$0xf]
  %v26 = vld [vmem:[%s0 + $0x38] sm:$0xf]
  %v27 = vld [vmem:[%s0 + $0x3c] sm:$0xf]
  %v28 = vmax.bf16 %v12, 0
  %v29 = vmax.bf16 %v13, 0
  %v30 = vmax.bf16 %v14, 0
  %v31 = vmax.bf16 %v15, 0
  %v32 = vmax.bf16 %v16, 0
  %v33 = vmax.bf16 %v17, 0
  %v34 = vmax.bf16 %v18, 0
  %v35 = vmax.bf16 %v19, 0
  %v36 = vmax.bf16 %v20, 0
  %v37 = vmax.bf16 %v21, 0
  %v38 = vmax.bf16 %v22, 0
  %v39 = vmax.bf16 %v23, 0
  %v40 = vmax.bf16 %v24, 0
  %v41 = vmax.bf16 %v25, 0
  %v42 = vmax.bf16 %v26, 0
  %v43 = vmax.bf16 %v27, 0
  %v44 = vld [vmem:[%s1] sm:$0xf]
  %v45 = vld [vmem:[%s1 + $0x4] sm:$0xf]
  %v46 = vld [vmem:[%s1 + $0x8] sm:$0xf]
  %v47 = vld [vmem:[%s1 + $0xc] sm:$0xf]
  %v64 = vunpack.c.l.b16 %v28
  %v65 = vunpack.c.l.b16 %v29
  %v66 = vunpack.c.l.b16 %v30
  %v67 = vunpack.c.l.b16 %v31
  %v68 = vunpack.c.l.b16 %v32
  %v69 = vunpack.c.l.b16 %v33
  %v70 = vunpack.c.l.b16 %v34
  %v71 = vunpack.c.l.b16 %v35
  %v72 = vunpack.c.l.b16 %v36
  %v73 = vunpack.c.l.b16 %v37
  %v74 = vunpack.c.l.b16 %v38
  %v75 = vunpack.c.l.b16 %v39
  %v76 = vunpack.c.l.b16 %v40
  %v77 = vunpack.c.l.b16 %v41
  %v78 = vunpack.c.l.b16 %v42
  %v79 = vunpack.c.l.b16 %v43
  %v80 = vpack.c.b16 %v65, %v64
  %v81 = vpack.c.b16 %v67, %v66
  %v82 = vpack.c.b16 %v69, %v68
  %v83 = vpack.c.b16 %v71, %v70
  %v84 = vpack.c.b16 %v73, %v72
  %v85 = vpack.c.b16 %v75, %v74
  %v86 = vpack.c.b16 %v77, %v76
  %v87 = vpack.c.b16 %v79, %v78
  %v92 = vunpack.c.l.b16 %v44
  %v93 = vunpack.c.l.b16 %v45
  %v94 = vunpack.c.l.b16 %v46
  %v95 = vunpack.c.l.b16 %v47
  %v96 = vpack.c.b16 %v93, %v92
  %v97 = vpack.c.b16 %v95, %v94
  %vm100 = vcmask 261120
  %v102 = vsel %vm100, %v80, 0
  %v105 = vsel %vm100, %v81, 0
  %v108 = vsel %vm100, %v82, 0
  %v111 = vsel %vm100, %v83, 0
  %v114 = vsel %vm100, %v84, 0
  %v117 = vsel %vm100, %v85, 0
  %v120 = vsel %vm100, %v86, 0
  %v123 = vsel %vm100, %v87, 0
  %125 = vmatprep.subr.bf16.mxu0 0
  %126 = vmatpush1.bf16.msra.mxu0 0
  %127 = vmatprep.subr.bf16.mxu0 0
  %128 = vmatpush1.bf16.msra.mxu0 0
  %129 = vmatprep.subr.bf16.mxu0 0
  %130 = vmatpush1.bf16.msra.mxu0 0
  %131 = vmatprep.subr.bf16.mxu0 0
  %132 = vmatpush1.bf16.msra.mxu0 0
  %133 = vmatprep.subr.bf16.mxu0 0
  %134 = vmatpush1.bf16.msra.mxu0 0
  %135 = vmatprep.subr.bf16.mxu0 0
  %136 = vmatpush1.bf16.msra.mxu0 0
  %137 = vmatprep.subr.bf16.mxu0 0
  %138 = vmatpush1.bf16.msra.mxu0 %v97
  %139 = vmatprep.subr.bf16.mxu0 0
  %140 = vmatpush1.bf16.msra.mxu0 %v96
  %141 = vmatprep.subr.bf16.mxu0 0
  %142 = vmatpush2.bf16.msra.mxu0 0
  %143 = vmatprep.subr.bf16.mxu0 0
  %144 = vmatpush2.bf16.msra.mxu0 0
  %145 = vmatprep.subr.bf16.mxu0 0
  %146 = vmatpush2.bf16.msra.mxu0 0
  %147 = vmatprep.subr.bf16.mxu0 0
  %148 = vmatpush2.bf16.msra.mxu0 0
  %149 = vmatprep.subr.bf16.mxu0 0
  %150 = vmatpush2.bf16.msra.mxu0 0
  %151 = vmatprep.subr.bf16.mxu0 0
  %152 = vmatpush2.bf16.msra.mxu0 0
  %153 = vmatprep.subr.bf16.mxu0 0
  %154 = vmatpush2.bf16.msra.mxu0 0
  %155 = vmatprep.subr.bf16.mxu0 0
  %156 = vmatpush2.bf16.msra.mxu0 0
  %157 = vmatprep.mubr.bf16.mxu0 0
  %158 = vmatmul.mubr.bf16.gmra.mxu0 %v102
  %v159 = vpop.f32.mrf.mxu0
  %v160 = vadd.f32 0.0, %v159
  %v161 = vpop.f32.mrf.mxu0
  %v162 = vpop.f32.mrf.mxu0
  %v163 = vadd.f32 0.0, %v162
  %v164 = vpop.f32.mrf.mxu0
  %165 = vmatprep.mubr.bf16.mxu0 0
  %166 = vmatmul.mubr.bf16.gmra.mxu0 %v105
  %v167 = vpop.f32.mrf.mxu0
  %v168 = vadd.f32 0.0, %v167
  %v169 = vpop.f32.mrf.mxu0
  %v170 = vpop.f32.mrf.mxu0
  %v171 = vadd.f32 0.0, %v170
  %v172 = vpop.f32.mrf.mxu0
  %173 = vmatprep.mubr.bf16.mxu0 0
  %174 = vmatmul.mubr.bf16.gmra.mxu0 %v108
  %v175 = vpop.f32.mrf.mxu0
  %v176 = vadd.f32 0.0, %v175
  %v177 = vpop.f32.mrf.mxu0
  %v178 = vpop.f32.mrf.mxu0
  %v179 = vadd.f32 0.0, %v178
  %v180 = vpop.f32.mrf.mxu0
  %181 = vmatprep.mubr.bf16.mxu0 0
  %182 = vmatmul.mubr.bf16.gmra.mxu0 %v111
  %v183 = vpop.f32.mrf.mxu0
  %v184 = vadd.f32 0.0, %v183
  %v185 = vpop.f32.mrf.mxu0
  %v186 = vpop.f32.mrf.mxu0
  %v187 = vadd.f32 0.0, %v186
  %v188 = vpop.f32.mrf.mxu0
  %189 = vmatprep.mubr.bf16.mxu0 0
  %190 = vmatmul.mubr.bf16.gmra.mxu0 %v114
  %v191 = vpop.f32.mrf.mxu0
  %v192 = vadd.f32 0.0, %v191
  %v193 = vpop.f32.mrf.mxu0
  %v194 = vpop.f32.mrf.mxu0
  %v195 = vadd.f32 0.0, %v194
  %v196 = vpop.f32.mrf.mxu0
  %197 = vmatprep.mubr.bf16.mxu0 0
  %198 = vmatmul.mubr.bf16.gmra.mxu0 %v117
  %v199 = vpop.f32.mrf.mxu0
  %v200 = vadd.f32 0.0, %v199
  %v201 = vpop.f32.mrf.mxu0
  %v202 = vpop.f32.mrf.mxu0
  %v203 = vadd.f32 0.0, %v202
  %v204 = vpop.f32.mrf.mxu0
  %205 = vmatprep.mubr.bf16.mxu0 0
  %206 = vmatmul.mubr.bf16.gmra.mxu0 %v120
  %v207 = vpop.f32.mrf.mxu0
  %v208 = vadd.f32 0.0, %v207
  %v209 = vpop.f32.mrf.mxu0
  %v210 = vpop.f32.mrf.mxu0
  %v211 = vadd.f32 0.0, %v210
  %v212 = vpop.f32.mrf.mxu0
  %213 = vmatprep.mubr.bf16.mxu0 0
  %214 = vmatmul.mubr.bf16.gmra.mxu0 %v123
  %v215 = vpop.f32.mrf.mxu0
  %v216 = vadd.f32 0.0, %v215
  %v217 = vpop.f32.mrf.mxu0
  %v218 = vpop.f32.mrf.mxu0
  %v219 = vadd.f32 0.0, %v218
  %v220 = vpop.f32.mrf.mxu0
  %221 = vdwg.mxu0
  %v222 = vpack.c.bf16 %v163, %v160
  %v223 = vpack.c.bf16 %v171, %v168
  %v224 = vpack.c.bf16 %v179, %v176
  %v225 = vpack.c.bf16 %v187, %v184
  %v226 = vpack.c.bf16 %v195, %v192
  %v227 = vpack.c.bf16 %v203, %v200
  %v228 = vpack.c.bf16 %v211, %v208
  %v229 = vpack.c.bf16 %v219, %v216
  %v238 = vunpack.c.l.b16 %v222
  %v239 = vunpack.c.h.b16 %v222
  %v240 = vunpack.c.l.b16 %v223
  %v241 = vunpack.c.h.b16 %v223
  %v242 = vunpack.c.l.b16 %v224
  %v243 = vunpack.c.h.b16 %v224
  %v244 = vunpack.c.l.b16 %v225
  %v245 = vunpack.c.h.b16 %v225
  %v246 = vunpack.c.l.b16 %v226
  %v247 = vunpack.c.h.b16 %v226
  %v248 = vunpack.c.l.b16 %v227
  %v249 = vunpack.c.h.b16 %v227
  %v250 = vunpack.c.l.b16 %v228
  %v251 = vunpack.c.h.b16 %v228
  %v252 = vunpack.c.l.b16 %v229
  %v253 = vunpack.c.h.b16 %v229
  %v254 = vpack.c.b16 %v238, %v238
  %v255 = vpack.c.b16 %v239, %v239
  %v256 = vpack.c.b16 %v240, %v240
  %v257 = vpack.c.b16 %v241, %v241
  %v258 = vpack.c.b16 %v242, %v242
  %v259 = vpack.c.b16 %v243, %v243
  %v260 = vpack.c.b16 %v244, %v244
  %v261 = vpack.c.b16 %v245, %v245
  %v262 = vpack.c.b16 %v246, %v246
  %v263 = vpack.c.b16 %v247, %v247
  %v264 = vpack.c.b16 %v248, %v248
  %v265 = vpack.c.b16 %v249, %v249
  %v266 = vpack.c.b16 %v250, %v250
  %v267 = vpack.c.b16 %v251, %v251
  %v268 = vpack.c.b16 %v252, %v252
  %v269 = vpack.c.b16 %v253, %v253
  %286 = vst [vmem:[%s2] sm:$0xf] %v254
  %287 = vst [vmem:[%s2 + $0x4] sm:$0xf] %v255
  %288 = vst [vmem:[%s2 + $0x8] sm:$0xf] %v256
  %289 = vst [vmem:[%s2 + $0xc] sm:$0xf] %v257
  %290 = vst [vmem:[%s2 + $0x10] sm:$0xf] %v258
  %291 = vst [vmem:[%s2 + $0x14] sm:$0xf] %v259
  %292 = vst [vmem:[%s2 + $0x18] sm:$0xf] %v260
  %293 = vst [vmem:[%s2 + $0x1c] sm:$0xf] %v261
  %294 = vst [vmem:[%s2 + $0x20] sm:$0xf] %v262
  %295 = vst [vmem:[%s2 + $0x24] sm:$0xf] %v263
  %296 = vst [vmem:[%s2 + $0x28] sm:$0xf] %v264
  %297 = vst [vmem:[%s2 + $0x2c] sm:$0xf] %v265
  %298 = vst [vmem:[%s2 + $0x30] sm:$0xf] %v266
  %299 = vst [vmem:[%s2 + $0x34] sm:$0xf] %v267
  %300 = vst [vmem:[%s2 + $0x38] sm:$0xf] %v268
  %301 = vst [vmem:[%s2 + $0x3c] sm:$0xf] %v269
  // Predicated region
  $region10: #{gcn_forward.4} parent=0 // pred_check
    _
  $region11: #{gcn_forward.4} parent=0 // pred_check_branch
    %303 = sbr.rel (0) target = $region13
  $region12: #{gcn_forward.4} parent=0 // pred_region
    _
  $region13: #{gcn_forward.4} parent=0 // pred_fallthru
    _
  // Predicated region
  $region14: #{gcn_forward.4} parent=0 // pred_check
    _
  $region15: #{gcn_forward.4} parent=0 // pred_check_branch
    %305 = sbr.rel (0) target = $region17
  $region16: #{gcn_forward.4} parent=0 // pred_region
    _
  $region17: #{gcn_forward.4} parent=0 // pred_fallthru
    _

// kernel: gcn_forward.5
$region0: #{gcn_forward.5}
  #allocation0 [shape = 'u32[]', space=smem, size = 0x4, offset = 0x4, fixed_abs, tag = 'smem constant byte address 0x4 - core index']
  #allocation1 [shape = 'u32[144,128]{1,0:T(1,128)}', space=vmem, size = 0x12000, scoped, tag = 'internal scratch']
  %s0 = inlined_call_operand.vmem [shape: bf16[128,128], index: 0, kind: input, shape index: {}]
  %s1 = inlined_call_operand.vmem [shape: f32[1,128], index: 1, kind: input, shape index: {}]
  %s2 = inlined_call_operand.vmem [shape: f32[128,1], index: 2, kind: input, shape index: {}]
  %s3 = inlined_call_operand.vmem [shape: s8[128,128], index: 3, kind: input, shape index: {}]
  %s4 = inlined_call_operand.vmem [shape: bf16[128,128], index: 4, kind: output, shape index: {}]
  %s5 = sld [smem:[#allocation0]]
  $region26: #{gcn_forward.5} parent=0
    _
  %s7 = ssub.s32 1, %s5
  %s8 = scalar_select 0, %s7, %s5
  // Predicated region
  $region2: #{gcn_forward.5} parent=0 // pred_check
    _
  $region3: #{gcn_forward.5} parent=0 // pred_check_branch
    %10 = sbr.rel (0) target = $region5
  $region4: #{gcn_forward.5} parent=0 // pred_region
    _
  $region5: #{gcn_forward.5} parent=0 // pred_fallthru
    _
  // Predicated region
  $region6: #{gcn_forward.5} parent=0 // pred_check
    _
  $region7: #{gcn_forward.5} parent=0 // pred_check_branch
    %12 = sbr.rel (0) target = $region9
  $region8: #{gcn_forward.5} parent=0 // pred_region
    _
  $region9: #{gcn_forward.5} parent=0 // pred_fallthru
    _
  // Predicated region
  $region10: #{gcn_forward.5} parent=0 // pred_check
    _
  $region11: #{gcn_forward.5} parent=0 // pred_check_branch
    %14 = sbr.rel (0) target = $region13
  $region12: #{gcn_forward.5} parent=0 // pred_region
    _
  $region13: #{gcn_forward.5} parent=0 // pred_fallthru
    _
  // Predicated region
  $region14: #{gcn_forward.5} parent=0 // pred_check
    _
  $region15: #{gcn_forward.5} parent=0 // pred_check_branch
    %16 = sbr.rel (0) target = $region17
  $region16: #{gcn_forward.5} parent=0 // pred_region
    _
  $region17: #{gcn_forward.5} parent=0 // pred_fallthru
    _
  %v18 = vld [vmem:[%s3] sm:$0xff]
  %v19 = vld [vmem:[%s3 + $0x8] sm:$0xff]
  %v20 = vld [vmem:[%s3 + $0x10] sm:$0xff]
  %v21 = vld [vmem:[%s3 + $0x18] sm:$0xff]
  %v22 = vunpack.c.l.s8.bf16 %v18
  %v23 = vunpack.c.h.s8.bf16 %v18
  %v24 = vunpack.c.l.s8.bf16 %v19
  %v25 = vunpack.c.h.s8.bf16 %v19
  %v26 = vunpack.c.l.s8.bf16 %v20
  %v27 = vunpack.c.h.s8.bf16 %v20
  %v28 = vunpack.c.l.s8.bf16 %v21
  %v29 = vunpack.c.h.s8.bf16 %v21
  %v30 = vld [vmem:[%s0] sm:$0xf]
  %v31 = vld [vmem:[%s0 + $0x4] sm:$0xf]
  %v32 = vld [vmem:[%s0 + $0x8] sm:$0xf]
  %v33 = vld [vmem:[%s0 + $0xc] sm:$0xf]
  %v34 = vld [vmem:[%s0 + $0x10] sm:$0xf]
  %v35 = vld [vmem:[%s0 + $0x14] sm:$0xf]
  %v36 = vld [vmem:[%s0 + $0x18] sm:$0xf]
  %v37 = vld [vmem:[%s0 + $0x1c] sm:$0xf]
  %v38 = vld [vmem:[%s0 + $0x20] sm:$0xf]
  %v39 = vld [vmem:[%s0 + $0x24] sm:$0xf]
  %v40 = vld [vmem:[%s0 + $0x28] sm:$0xf]
  %v41 = vld [vmem:[%s0 + $0x2c] sm:$0xf]
  %v42 = vld [vmem:[%s0 + $0x30] sm:$0xf]
  %v43 = vld [vmem:[%s0 + $0x34] sm:$0xf]
  %v44 = vld [vmem:[%s0 + $0x38] sm:$0xf]
  %v45 = vld [vmem:[%s0 + $0x3c] sm:$0xf]
  %v62 = vunpack.c.l.b16 %v30
  %v63 = vunpack.c.l.b16 %v31
  %v64 = vunpack.c.l.b16 %v32
  %v65 = vunpack.c.l.b16 %v33
  %v66 = vunpack.c.l.b16 %v34
  %v67 = vunpack.c.l.b16 %v35
  %v68 = vunpack.c.l.b16 %v36
  %v69 = vunpack.c.l.b16 %v37
  %v70 = vunpack.c.l.b16 %v38
  %v71 = vunpack.c.l.b16 %v39
  %v72 = vunpack.c.l.b16 %v40
  %v73 = vunpack.c.l.b16 %v41
  %v74 = vunpack.c.l.b16 %v42
  %v75 = vunpack.c.l.b16 %v43
  %v76 = vunpack.c.l.b16 %v44
  %v77 = vunpack.c.l.b16 %v45
  %v78 = vpack.c.b16 %v63, %v62
  %v79 = vpack.c.b16 %v65, %v64
  %v80 = vpack.c.b16 %v67, %v66
  %v81 = vpack.c.b16 %v69, %v68
  %v82 = vpack.c.b16 %v71, %v70
  %v83 = vpack.c.b16 %v73, %v72
  %v84 = vpack.c.b16 %v75, %v74
  %v85 = vpack.c.b16 %v77, %v76
  %94 = vmatprep.subr.bf16.mxu0 0
  %95 = vmatpush1.bf16.msra.mxu0 %v85
  %96 = vmatprep.subr.bf16.mxu0 0
  %97 = vmatpush1.bf16.msra.mxu0 %v84
  %98 = vmatprep.subr.bf16.mxu0 0
  %99 = vmatpush1.bf16.msra.mxu0 %v83
  %100 = vmatprep.subr.bf16.mxu0 0
  %101 = vmatpush1.bf16.msra.mxu0 %v82
  %102 = vmatprep.subr.bf16.mxu0 0
  %103 = vmatpush1.bf16.msra.mxu0 %v81
  %104 = vmatprep.subr.bf16.mxu0 0
  %105 = vmatpush1.bf16.msra.mxu0 %v80
  %106 = vmatprep.subr.bf16.mxu0 0
  %107 = vmatpush1.bf16.msra.mxu0 %v79
  %108 = vmatprep.subr.bf16.mxu0 0
  %109 = vmatpush1.bf16.msra.mxu0 %v78
  %110 = vmatprep.subr.bf16.mxu0 0
  %111 = vmatpush2.bf16.msra.mxu0 0
  %112 = vmatprep.subr.bf16.mxu0 0
  %113 = vmatpush2.bf16.msra.mxu0 0
  %114 = vmatprep.subr.bf16.mxu0 0
  %115 = vmatpush2.bf16.msra.mxu0 0
  %116 = vmatprep.subr.bf16.mxu0 0
  %117 = vmatpush2.bf16.msra.mxu0 0
  %118 = vmatprep.subr.bf16.mxu0 0
  %119 = vmatpush2.bf16.msra.mxu0 0
  %120 = vmatprep.subr.bf16.mxu0 0
  %121 = vmatpush2.bf16.msra.mxu0 0
  %122 = vmatprep.subr.bf16.mxu0 0
  %123 = vmatpush2.bf16.msra.mxu0 0
  %124 = vmatprep.subr.bf16.mxu0 0
  %125 = vmatpush2.bf16.msra.mxu0 0
  %126 = vmatprep.mubr.bf16.mxu0 0
  %127 = vmatmul.mubr.bf16.gmra.mxu0 %v22
  %v128 = vpop.f32.mrf.mxu0
  %v129 = vadd.f32 0.0, %v128
  %v130 = vpop.f32.mrf.mxu0
  %v131 = vpop.f32.mrf.mxu0
  %v132 = vadd.f32 0.0, %v131
  %v133 = vpop.f32.mrf.mxu0
  %134 = vmatprep.mubr.bf16.mxu0 0
  %135 = vmatmul.mubr.bf16.gmra.mxu0 %v23
  %v136 = vpop.f32.mrf.mxu0
  %v137 = vadd.f32 0.0, %v136
  %v138 = vpop.f32.mrf.mxu0
  %v139 = vpop.f32.mrf.mxu0
  %v140 = vadd.f32 0.0, %v139
  %v141 = vpop.f32.mrf.mxu0
  %142 = vmatprep.mubr.bf16.mxu0 0
  %143 = vmatmul.mubr.bf16.gmra.mxu0 %v24
  %v144 = vpop.f32.mrf.mxu0
  %v145 = vadd.f32 0.0, %v144
  %v146 = vpop.f32.mrf.mxu0
  %v147 = vpop.f32.mrf.mxu0
  %v148 = vadd.f32 0.0, %v147
  %v149 = vpop.f32.mrf.mxu0
  %150 = vmatprep.mubr.bf16.mxu0 0
  %151 = vmatmul.mubr.bf16.gmra.mxu0 %v25
  %v152 = vpop.f32.mrf.mxu0
  %v153 = vadd.f32 0.0, %v152
  %v154 = vpop.f32.mrf.mxu0
  %v155 = vpop.f32.mrf.mxu0
  %v156 = vadd.f32 0.0, %v155
  %v157 = vpop.f32.mrf.mxu0
  %158 = vmatprep.mubr.bf16.mxu0 0
  %159 = vmatmul.mubr.bf16.gmra.mxu0 %v26
  %v160 = vpop.f32.mrf.mxu0
  %v161 = vadd.f32 0.0, %v160
  %v162 = vpop.f32.mrf.mxu0
  %v163 = vpop.f32.mrf.mxu0
  %v164 = vadd.f32 0.0, %v163
  %v165 = vpop.f32.mrf.mxu0
  %166 = vmatprep.mubr.bf16.mxu0 0
  %167 = vmatmul.mubr.bf16.gmra.mxu0 %v27
  %v168 = vpop.f32.mrf.mxu0
  %v169 = vadd.f32 0.0, %v168
  %v170 = vpop.f32.mrf.mxu0
  %v171 = vpop.f32.mrf.mxu0
  %v172 = vadd.f32 0.0, %v171
  %v173 = vpop.f32.mrf.mxu0
  %174 = vmatprep.mubr.bf16.mxu0 0
  %175 = vmatmul.mubr.bf16.gmra.mxu0 %v28
  %v176 = vpop.f32.mrf.mxu0
  %v177 = vadd.f32 0.0, %v176
  %v178 = vpop.f32.mrf.mxu0
  %v179 = vpop.f32.mrf.mxu0
  %v180 = vadd.f32 0.0, %v179
  %v181 = vpop.f32.mrf.mxu0
  %182 = vmatprep.mubr.bf16.mxu0 0
  %183 = vmatmul.mubr.bf16.gmra.mxu0 %v29
  %v184 = vpop.f32.mrf.mxu0
  %v185 = vadd.f32 0.0, %v184
  %v186 = vpop.f32.mrf.mxu0
  %v187 = vpop.f32.mrf.mxu0
  %v188 = vadd.f32 0.0, %v187
  %v189 = vpop.f32.mrf.mxu0
  %190 = vdwg.mxu0
  %v191 = vld [vmem:[%s2] sm:$0xff]
  %v192 = vld [vmem:[%s2 + $0x8] sm:$0xff]
  %v193 = vld [vmem:[%s2 + $0x10] sm:$0xff]
  %v194 = vld [vmem:[%s2 + $0x18] sm:$0xff]
  %v195 = vld [vmem:[%s2 + $0x20] sm:$0xff]
  %v196 = vld [vmem:[%s2 + $0x28] sm:$0xff]
  %v197 = vld [vmem:[%s2 + $0x30] sm:$0xff]
  %v198 = vld [vmem:[%s2 + $0x38] sm:$0xff]
  %v199 = vld [vmem:[%s2 + $0x40] sm:$0xff]
  %v200 = vld [vmem:[%s2 + $0x48] sm:$0xff]
  %v201 = vld [vmem:[%s2 + $0x50] sm:$0xff]
  %v202 = vld [vmem:[%s2 + $0x58] sm:$0xff]
  %v203 = vld [vmem:[%s2 + $0x60] sm:$0xff]
  %v204 = vld [vmem:[%s2 + $0x68] sm:$0xff]
  %v205 = vld [vmem:[%s2 + $0x70] sm:$0xff]
  %v206 = vld [vmem:[%s2 + $0x78] sm:$0xff]
  %208 = vset.pattern.permute.xlu0 0
  %209 = vperm.xlu0 %208, %v191
  %v210 = vpop.permute.xlu0 %209
  %213 = vset.pattern.permute.xlu0 0
  %214 = vperm.xlu0 %213, %v192
  %v215 = vpop.permute.xlu0 %214
  %218 = vset.pattern.permute.xlu0 0
  %219 = vperm.xlu0 %218, %v193
  %v220 = vpop.permute.xlu0 %219
  %223 = vset.pattern.permute.xlu0 0
  %224 = vperm.xlu0 %223, %v194
  %v225 = vpop.permute.xlu0 %224
  %228 = vset.pattern.permute.xlu0 0
  %229 = vperm.xlu0 %228, %v195
  %v230 = vpop.permute.xlu0 %229
  %233 = vset.pattern.permute.xlu0 0
  %234 = vperm.xlu0 %233, %v196
  %v235 = vpop.permute.xlu0 %234
  %238 = vset.pattern.permute.xlu0 0
  %239 = vperm.xlu0 %238, %v197
  %v240 = vpop.permute.xlu0 %239
  %243 = vset.pattern.permute.xlu0 0
  %244 = vperm.xlu0 %243, %v198
  %v245 = vpop.permute.xlu0 %244
  %248 = vset.pattern.permute.xlu0 0
  %249 = vperm.xlu0 %248, %v199
  %v250 = vpop.permute.xlu0 %249
  %253 = vset.pattern.permute.xlu0 0
  %254 = vperm.xlu0 %253, %v200
  %v255 = vpop.permute.xlu0 %254
  %258 = vset.pattern.permute.xlu0 0
  %259 = vperm.xlu0 %258, %v201
  %v260 = vpop.permute.xlu0 %259
  %263 = vset.pattern.permute.xlu0 0
  %264 = vperm.xlu0 %263, %v202
  %v265 = vpop.permute.xlu0 %264
  %268 = vset.pattern.permute.xlu0 0
  %269 = vperm.xlu0 %268, %v203
  %v270 = vpop.permute.xlu0 %269
  %273 = vset.pattern.permute.xlu0 0
  %274 = vperm.xlu0 %273, %v204
  %v275 = vpop.permute.xlu0 %274
  %278 = vset.pattern.permute.xlu0 0
  %279 = vperm.xlu0 %278, %v205
  %v280 = vpop.permute.xlu0 %279
  %283 = vset.pattern.permute.xlu0 0
  %284 = vperm.xlu0 %283, %v206
  %v285 = vpop.permute.xlu0 %284
  %v287 = vmul.f32 %v129, %v210
  %v288 = vmul.f32 %v132, %v215
  %v289 = vmul.f32 %v137, %v220
  %v290 = vmul.f32 %v140, %v225
  %v291 = vmul.f32 %v145, %v230
  %v292 = vmul.f32 %v148, %v235
  %v293 = vmul.f32 %v153, %v240
  %v294 = vmul.f32 %v156, %v245
  %v295 = vmul.f32 %v161, %v250
  %v296 = vmul.f32 %v164, %v255
  %v297 = vmul.f32 %v169, %v260
  %v298 = vmul.f32 %v172, %v265
  %v299 = vmul.f32 %v177, %v270
  %v300 = vmul.f32 %v180, %v275
  %v301 = vmul.f32 %v185, %v280
  %v302 = vmul.f32 %v188, %v285
  %v303 = vld [vmem:[%s1] sm:$0x1]
  %v305 = vlaneseq
  %v306 = vshrl.u32 %v305, 7
  %v307 = vsub.s32 0, %v306
  %v308 = vrot.slane %v303, %v307
  %v310 = vadd.f32 %v287, %v308
  %v311 = vadd.f32 %v288, %v308
  %v312 = vadd.f32 %v289, %v308
  %v313 = vadd.f32 %v290, %v308
  %v314 = vadd.f32 %v291, %v308
  %v315 = vadd.f32 %v292, %v308
  %v316 = vadd.f32 %v293, %v308
  %v317 = vadd.f32 %v294, %v308
  %v318 = vadd.f32 %v295, %v308
  %v319 = vadd.f32 %v296, %v308
  %v320 = vadd.f32 %v297, %v308
  %v321 = vadd.f32 %v298, %v308
  %v322 = vadd.f32 %v299, %v308
  %v323 = vadd.f32 %v300, %v308
  %v324 = vadd.f32 %v301, %v308
  %v325 = vadd.f32 %v302, %v308
  %v326 = vmax.f32 %v310, 0.0
  %v327 = vmax.f32 %v311, 0.0
  %v328 = vmax.f32 %v312, 0.0
  %v329 = vmax.f32 %v313, 0.0
  %v330 = vmax.f32 %v314, 0.0
  %v331 = vmax.f32 %v315, 0.0
  %v332 = vmax.f32 %v316, 0.0
  %v333 = vmax.f32 %v317, 0.0
  %v334 = vmax.f32 %v318, 0.0
  %v335 = vmax.f32 %v319, 0.0
  %v336 = vmax.f32 %v320, 0.0
  %v337 = vmax.f32 %v321, 0.0
  %v338 = vmax.f32 %v322, 0.0
  %v339 = vmax.f32 %v323, 0.0
  %v340 = vmax.f32 %v324, 0.0
  %v341 = vmax.f32 %v325, 0.0
  %v342 = vpack.c.bf16 %v327, %v326
  %v343 = vpack.c.bf16 %v329, %v328
  %v344 = vpack.c.bf16 %v331, %v330
  %v345 = vpack.c.bf16 %v333, %v332
  %v346 = vpack.c.bf16 %v335, %v334
  %v347 = vpack.c.bf16 %v337, %v336
  %v348 = vpack.c.bf16 %v339, %v338
  %v349 = vpack.c.bf16 %v341, %v340
  %v358 = vunpack.c.l.b16 %v342
  %v359 = vunpack.c.h.b16 %v342
  %v360 = vunpack.c.l.b16 %v343
  %v361 = vunpack.c.h.b16 %v343
  %v362 = vunpack.c.l.b16 %v344
  %v363 = vunpack.c.h.b16 %v344
  %v364 = vunpack.c.l.b16 %v345
  %v365 = vunpack.c.h.b16 %v345
  %v366 = vunpack.c.l.b16 %v346
  %v367 = vunpack.c.h.b16 %v346
  %v368 = vunpack.c.l.b16 %v347
  %v369 = vunpack.c.h.b16 %v347
  %v370 = vunpack.c.l.b16 %v348
  %v371 = vunpack.c.h.b16 %v348
  %v372 = vunpack.c.l.b16 %v349
  %v373 = vunpack.c.h.b16 %v349
  %v374 = vpack.c.b16 %v358, %v358
  %v375 = vpack.c.b16 %v359, %v359
  %v376 = vpack.c.b16 %v360, %v360
  %v377 = vpack.c.b16 %v361, %v361
  %v378 = vpack.c.b16 %v362, %v362
  %v379 = vpack.c.b16 %v363, %v363
  %v380 = vpack.c.b16 %v364, %v364
  %v381 = vpack.c.b16 %v365, %v365
  %v382 = vpack.c.b16 %v366, %v366
  %v383 = vpack.c.b16 %v367, %v367
  %v384 = vpack.c.b16 %v368, %v368
  %v385 = vpack.c.b16 %v369, %v369
  %v386 = vpack.c.b16 %v370, %v370
  %v387 = vpack.c.b16 %v371, %v371
  %v388 = vpack.c.b16 %v372, %v372
  %v389 = vpack.c.b16 %v373, %v373
  %406 = vst [vmem:[%s4] sm:$0xf] %v374
  %407 = vst [vmem:[%s4 + $0x4] sm:$0xf] %v375
  %408 = vst [vmem:[%s4 + $0x8] sm:$0xf] %v376
  %409 = vst [vmem:[%s4 + $0xc] sm:$0xf] %v377
  %410 = vst [vmem:[%s4 + $0x10] sm:$0xf] %v378
  %411 = vst [vmem:[%s4 + $0x14] sm:$0xf] %v379
  %412 = vst [vmem:[%s4 + $0x18] sm:$0xf] %v380
  %413 = vst [vmem:[%s4 + $0x1c] sm:$0xf] %v381
  %414 = vst [vmem:[%s4 + $0x20] sm:$0xf] %v382
  %415 = vst [vmem:[%s4 + $0x24] sm:$0xf] %v383
  %416 = vst [vmem:[%s4 + $0x28] sm:$0xf] %v384
  %417 = vst [vmem:[%s4 + $0x2c] sm:$0xf] %v385
  %418 = vst [vmem:[%s4 + $0x30] sm:$0xf] %v386
  %419 = vst [vmem:[%s4 + $0x34] sm:$0xf] %v387
  %420 = vst [vmem:[%s4 + $0x38] sm:$0xf] %v388
  %421 = vst [vmem:[%s4 + $0x3c] sm:$0xf] %v389
  // Predicated region
  $region18: #{gcn_forward.5} parent=0 // pred_check
    _
  $region19: #{gcn_forward.5} parent=0 // pred_check_branch
    %423 = sbr.rel (0) target = $region21
  $region20: #{gcn_forward.5} parent=0 // pred_region
    _
  $region21: #{gcn_forward.5} parent=0 // pred_fallthru
    _
  // Predicated region
  $region22: #{gcn_forward.5} parent=0 // pred_check
    _
  $region23: #{gcn_forward.5} parent=0 // pred_check_branch
    %425 = sbr.rel (0) target = $region25
  $region24: #{gcn_forward.5} parent=0 // pred_region
    _
  $region25: #{gcn_forward.5} parent=0 // pred_fallthru
    _

// kernel: gcn_forward.6
$region0: #{gcn_forward.6}
  #allocation0 [shape = 'u32[]', space=smem, size = 0x4, offset = 0x4, fixed_abs, tag = 'smem constant byte address 0x4 - core index']
  #allocation1 [shape = 'u32[144,128]{1,0:T(1,128)}', space=vmem, size = 0x12000, scoped, tag = 'internal scratch']
  %s0 = inlined_call_operand.vmem [shape: bf16[128,128], index: 0, kind: input, shape index: {}]
  %s1 = inlined_call_operand.vmem [shape: bf16[128,128], index: 1, kind: input, shape index: {}]
  %s2 = inlined_call_operand.vmem [shape: bf16[128,128], index: 2, kind: output, shape index: {}]
  %s3 = sld [smem:[#allocation0]]
  $region18: #{gcn_forward.6} parent=0
    _
  %s5 = ssub.s32 1, %s3
  %s6 = scalar_select 0, %s5, %s3
  // Predicated region
  $region2: #{gcn_forward.6} parent=0 // pred_check
    _
  $region3: #{gcn_forward.6} parent=0 // pred_check_branch
    %8 = sbr.rel (0) target = $region5
  $region4: #{gcn_forward.6} parent=0 // pred_region
    _
  $region5: #{gcn_forward.6} parent=0 // pred_fallthru
    _
  // Predicated region
  $region6: #{gcn_forward.6} parent=0 // pred_check
    _
  $region7: #{gcn_forward.6} parent=0 // pred_check_branch
    %10 = sbr.rel (0) target = $region9
  $region8: #{gcn_forward.6} parent=0 // pred_region
    _
  $region9: #{gcn_forward.6} parent=0 // pred_fallthru
    _
  %v12 = vld [vmem:[%s0] sm:$0xf]
  %v13 = vld [vmem:[%s0 + $0x4] sm:$0xf]
  %v14 = vld [vmem:[%s0 + $0x8] sm:$0xf]
  %v15 = vld [vmem:[%s0 + $0xc] sm:$0xf]
  %v16 = vld [vmem:[%s0 + $0x10] sm:$0xf]
  %v17 = vld [vmem:[%s0 + $0x14] sm:$0xf]
  %v18 = vld [vmem:[%s0 + $0x18] sm:$0xf]
  %v19 = vld [vmem:[%s0 + $0x1c] sm:$0xf]
  %v20 = vld [vmem:[%s0 + $0x20] sm:$0xf]
  %v21 = vld [vmem:[%s0 + $0x24] sm:$0xf]
  %v22 = vld [vmem:[%s0 + $0x28] sm:$0xf]
  %v23 = vld [vmem:[%s0 + $0x2c] sm:$0xf]
  %v24 = vld [vmem:[%s0 + $0x30] sm:$0xf]
  %v25 = vld [vmem:[%s0 + $0x34] sm:$0xf]
  %v26 = vld [vmem:[%s0 + $0x38] sm:$0xf]
  %v27 = vld [vmem:[%s0 + $0x3c] sm:$0xf]
  %v28 = vld [vmem:[%s1] sm:$0xf]
  %v29 = vld [vmem:[%s1 + $0x4] sm:$0xf]
  %v30 = vld [vmem:[%s1 + $0x8] sm:$0xf]
  %v31 = vld [vmem:[%s1 + $0xc] sm:$0xf]
  %v32 = vld [vmem:[%s1 + $0x10] sm:$0xf]
  %v33 = vld [vmem:[%s1 + $0x14] sm:$0xf]
  %v34 = vld [vmem:[%s1 + $0x18] sm:$0xf]
  %v35 = vld [vmem:[%s1 + $0x1c] sm:$0xf]
  %v36 = vld [vmem:[%s1 + $0x20] sm:$0xf]
  %v37 = vld [vmem:[%s1 + $0x24] sm:$0xf]
  %v38 = vld [vmem:[%s1 + $0x28] sm:$0xf]
  %v39 = vld [vmem:[%s1 + $0x2c] sm:$0xf]
  %v40 = vld [vmem:[%s1 + $0x30] sm:$0xf]
  %v41 = vld [vmem:[%s1 + $0x34] sm:$0xf]
  %v42 = vld [vmem:[%s1 + $0x38] sm:$0xf]
  %v43 = vld [vmem:[%s1 + $0x3c] sm:$0xf]
  %v60 = vunpack.c.l.b16 %v12
  %v61 = vunpack.c.l.b16 %v13
  %v62 = vunpack.c.l.b16 %v14
  %v63 = vunpack.c.l.b16 %v15
  %v64 = vunpack.c.l.b16 %v16
  %v65 = vunpack.c.l.b16 %v17
  %v66 = vunpack.c.l.b16 %v18
  %v67 = vunpack.c.l.b16 %v19
  %v68 = vunpack.c.l.b16 %v20
  %v69 = vunpack.c.l.b16 %v21
  %v70 = vunpack.c.l.b16 %v22
  %v71 = vunpack.c.l.b16 %v23
  %v72 = vunpack.c.l.b16 %v24
  %v73 = vunpack.c.l.b16 %v25
  %v74 = vunpack.c.l.b16 %v26
  %v75 = vunpack.c.l.b16 %v27
  %v76 = vpack.c.b16 %v61, %v60
  %v77 = vpack.c.b16 %v63, %v62
  %v78 = vpack.c.b16 %v65, %v64
  %v79 = vpack.c.b16 %v67, %v66
  %v80 = vpack.c.b16 %v69, %v68
  %v81 = vpack.c.b16 %v71, %v70
  %v82 = vpack.c.b16 %v73, %v72
  %v83 = vpack.c.b16 %v75, %v74
  %v108 = vunpack.c.l.b16 %v28
  %v109 = vunpack.c.l.b16 %v29
  %v110 = vunpack.c.l.b16 %v30
  %v111 = vunpack.c.l.b16 %v31
  %v112 = vunpack.c.l.b16 %v32
  %v113 = vunpack.c.l.b16 %v33
  %v114 = vunpack.c.l.b16 %v34
  %v115 = vunpack.c.l.b16 %v35
  %v116 = vunpack.c.l.b16 %v36
  %v117 = vunpack.c.l.b16 %v37
  %v118 = vunpack.c.l.b16 %v38
  %v119 = vunpack.c.l.b16 %v39
  %v120 = vunpack.c.l.b16 %v40
  %v121 = vunpack.c.l.b16 %v41
  %v122 = vunpack.c.l.b16 %v42
  %v123 = vunpack.c.l.b16 %v43
  %v124 = vpack.c.b16 %v109, %v108
  %v125 = vpack.c.b16 %v111, %v110
  %v126 = vpack.c.b16 %v113, %v112
  %v127 = vpack.c.b16 %v115, %v114
  %v128 = vpack.c.b16 %v117, %v116
  %v129 = vpack.c.b16 %v119, %v118
  %v130 = vpack.c.b16 %v121, %v120
  %v131 = vpack.c.b16 %v123, %v122
  %140 = vmatprep.subr.bf16.mxu0 0
  %141 = vmatpush1.bf16.msra.mxu0 %v131
  %142 = vmatprep.subr.bf16.mxu0 0
  %143 = vmatpush1.bf16.msra.mxu0 %v130
  %144 = vmatprep.subr.bf16.mxu0 0
  %145 = vmatpush1.bf16.msra.mxu0 %v129
  %146 = vmatprep.subr.bf16.mxu0 0
  %147 = vmatpush1.bf16.msra.mxu0 %v128
  %148 = vmatprep.subr.bf16.mxu0 0
  %149 = vmatpush1.bf16.msra.mxu0 %v127
  %150 = vmatprep.subr.bf16.mxu0 0
  %151 = vmatpush1.bf16.msra.mxu0 %v126
  %152 = vmatprep.subr.bf16.mxu0 0
  %153 = vmatpush1.bf16.msra.mxu0 %v125
  %154 = vmatprep.subr.bf16.mxu0 0
  %155 = vmatpush1.bf16.msra.mxu0 %v124
  %156 = vmatprep.subr.bf16.mxu0 0
  %157 = vmatpush2.bf16.msra.mxu0 0
  %158 = vmatprep.subr.bf16.mxu0 0
  %159 = vmatpush2.bf16.msra.mxu0 0
  %160 = vmatprep.subr.bf16.mxu0 0
  %161 = vmatpush2.bf16.msra.mxu0 0
  %162 = vmatprep.subr.bf16.mxu0 0
  %163 = vmatpush2.bf16.msra.mxu0 0
  %164 = vmatprep.subr.bf16.mxu0 0
  %165 = vmatpush2.bf16.msra.mxu0 0
  %166 = vmatprep.subr.bf16.mxu0 0
  %167 = vmatpush2.bf16.msra.mxu0 0
  %168 = vmatprep.subr.bf16.mxu0 0
  %169 = vmatpush2.bf16.msra.mxu0 0
  %170 = vmatprep.subr.bf16.mxu0 0
  %171 = vmatpush2.bf16.msra.mxu0 0
  %172 = vmatprep.mubr.bf16.mxu0 0
  %173 = vmatmul.mubr.bf16.gmra.mxu0 %v76
  %v174 = vpop.f32.mrf.mxu0
  %v175 = vadd.f32 0.0, %v174
  %v176 = vpop.f32.mrf.mxu0
  %v177 = vpop.f32.mrf.mxu0
  %v178 = vadd.f32 0.0, %v177
  %v179 = vpop.f32.mrf.mxu0
  %180 = vmatprep.mubr.bf16.mxu0 0
  %181 = vmatmul.mubr.bf16.gmra.mxu0 %v77
  %v182 = vpop.f32.mrf.mxu0
  %v183 = vadd.f32 0.0, %v182
  %v184 = vpop.f32.mrf.mxu0
  %v185 = vpop.f32.mrf.mxu0
  %v186 = vadd.f32 0.0, %v185
  %v187 = vpop.f32.mrf.mxu0
  %188 = vmatprep.mubr.bf16.mxu0 0
  %189 = vmatmul.mubr.bf16.gmra.mxu0 %v78
  %v190 = vpop.f32.mrf.mxu0
  %v191 = vadd.f32 0.0, %v190
  %v192 = vpop.f32.mrf.mxu0
  %v193 = vpop.f32.mrf.mxu0
  %v194 = vadd.f32 0.0, %v193
  %v195 = vpop.f32.mrf.mxu0
  %196 = vmatprep.mubr.bf16.mxu0 0
  %197 = vmatmul.mubr.bf16.gmra.mxu0 %v79
  %v198 = vpop.f32.mrf.mxu0
  %v199 = vadd.f32 0.0, %v198
  %v200 = vpop.f32.mrf.mxu0
  %v201 = vpop.f32.mrf.mxu0
  %v202 = vadd.f32 0.0, %v201
  %v203 = vpop.f32.mrf.mxu0
  %204 = vmatprep.mubr.bf16.mxu0 0
  %205 = vmatmul.mubr.bf16.gmra.mxu0 %v80
  %v206 = vpop.f32.mrf.mxu0
  %v207 = vadd.f32 0.0, %v206
  %v208 = vpop.f32.mrf.mxu0
  %v209 = vpop.f32.mrf.mxu0
  %v210 = vadd.f32 0.0, %v209
  %v211 = vpop.f32.mrf.mxu0
  %212 = vmatprep.mubr.bf16.mxu0 0
  %213 = vmatmul.mubr.bf16.gmra.mxu0 %v81
  %v214 = vpop.f32.mrf.mxu0
  %v215 = vadd.f32 0.0, %v214
  %v216 = vpop.f32.mrf.mxu0
  %v217 = vpop.f32.mrf.mxu0
  %v218 = vadd.f32 0.0, %v217
  %v219 = vpop.f32.mrf.mxu0
  %220 = vmatprep.mubr.bf16.mxu0 0
  %221 = vmatmul.mubr.bf16.gmra.mxu0 %v82
  %v222 = vpop.f32.mrf.mxu0
  %v223 = vadd.f32 0.0, %v222
  %v224 = vpop.f32.mrf.mxu0
  %v225 = vpop.f32.mrf.mxu0
  %v226 = vadd.f32 0.0, %v225
  %v227 = vpop.f32.mrf.mxu0
  %228 = vmatprep.mubr.bf16.mxu0 0
  %229 = vmatmul.mubr.bf16.gmra.mxu0 %v83
  %v230 = vpop.f32.mrf.mxu0
  %v231 = vadd.f32 0.0, %v230
  %v232 = vpop.f32.mrf.mxu0
  %v233 = vpop.f32.mrf.mxu0
  %v234 = vadd.f32 0.0, %v233
  %v235 = vpop.f32.mrf.mxu0
  %236 = vdwg.mxu0
  %v237 = vpack.c.bf16 %v178, %v175
  %v238 = vpack.c.bf16 %v186, %v183
  %v239 = vpack.c.bf16 %v194, %v191
  %v240 = vpack.c.bf16 %v202, %v199
  %v241 = vpack.c.bf16 %v210, %v207
  %v242 = vpack.c.bf16 %v218, %v215
  %v243 = vpack.c.bf16 %v226, %v223
  %v244 = vpack.c.bf16 %v234, %v231
  %v253 = vunpack.c.l.b16 %v237
  %v254 = vunpack.c.h.b16 %v237
  %v255 = vunpack.c.l.b16 %v238
  %v256 = vunpack.c.h.b16 %v238
  %v257 = vunpack.c.l.b16 %v239
  %v258 = vunpack.c.h.b16 %v239
  %v259 = vunpack.c.l.b16 %v240
  %v260 = vunpack.c.h.b16 %v240
  %v261 = vunpack.c.l.b16 %v241
  %v262 = vunpack.c.h.b16 %v241
  %v263 = vunpack.c.l.b16 %v242
  %v264 = vunpack.c.h.b16 %v242
  %v265 = vunpack.c.l.b16 %v243
  %v266 = vunpack.c.h.b16 %v243
  %v267 = vunpack.c.l.b16 %v244
  %v268 = vunpack.c.h.b16 %v244
  %v269 = vpack.c.b16 %v253, %v253
  %v270 = vpack.c.b16 %v254, %v254
  %v271 = vpack.c.b16 %v255, %v255
  %v272 = vpack.c.b16 %v256, %v256
  %v273 = vpack.c.b16 %v257, %v257
  %v274 = vpack.c.b16 %v258, %v258
  %v275 = vpack.c.b16 %v259, %v259
  %v276 = vpack.c.b16 %v260, %v260
  %v277 = vpack.c.b16 %v261, %v261
  %v278 = vpack.c.b16 %v262, %v262
  %v279 = vpack.c.b16 %v263, %v263
  %v280 = vpack.c.b16 %v264, %v264
  %v281 = vpack.c.b16 %v265, %v265
  %v282 = vpack.c.b16 %v266, %v266
  %v283 = vpack.c.b16 %v267, %v267
  %v284 = vpack.c.b16 %v268, %v268
  %301 = vst [vmem:[%s2] sm:$0xf] %v269
  %302 = vst [vmem:[%s2 + $0x4] sm:$0xf] %v270
  %303 = vst [vmem:[%s2 + $0x8] sm:$0xf] %v271
  %304 = vst [vmem:[%s2 + $0xc] sm:$0xf] %v272
  %305 = vst [vmem:[%s2 + $0x10] sm:$0xf] %v273
  %306 = vst [vmem:[%s2 + $0x14] sm:$0xf] %v274
  %307 = vst [vmem:[%s2 + $0x18] sm:$0xf] %v275
  %308 = vst [vmem:[%s2 + $0x1c] sm:$0xf] %v276
  %309 = vst [vmem:[%s2 + $0x20] sm:$0xf] %v277
  %310 = vst [vmem:[%s2 + $0x24] sm:$0xf] %v278
  %311 = vst [vmem:[%s2 + $0x28] sm:$0xf] %v279
  %312 = vst [vmem:[%s2 + $0x2c] sm:$0xf] %v280
  %313 = vst [vmem:[%s2 + $0x30] sm:$0xf] %v281
  %314 = vst [vmem:[%s2 + $0x34] sm:$0xf] %v282
  %315 = vst [vmem:[%s2 + $0x38] sm:$0xf] %v283
  %316 = vst [vmem:[%s2 + $0x3c] sm:$0xf] %v284
  // Predicated region
  $region10: #{gcn_forward.6} parent=0 // pred_check
    _
  $region11: #{gcn_forward.6} parent=0 // pred_check_branch
    %318 = sbr.rel (0) target = $region13
  $region12: #{gcn_forward.6} parent=0 // pred_region
    _
  $region13: #{gcn_forward.6} parent=0 // pred_fallthru
    _
  // Predicated region
  $region14: #{gcn_forward.6} parent=0 // pred_check
    _
  $region15: #{gcn_forward.6} parent=0 // pred_check_branch
    %320 = sbr.rel (0) target = $region17
  $region16: #{gcn_forward.6} parent=0 // pred_region
    _
  $region17: #{gcn_forward.6} parent=0 // pred_fallthru
    _

// kernel: gcn_forward.7
$region0: #{gcn_forward.7}
  #allocation0 [shape = 'u32[]', space=smem, size = 0x4, offset = 0x4, fixed_abs, tag = 'smem constant byte address 0x4 - core index']
  #allocation1 [shape = 'u32[144,128]{1,0:T(1,128)}', space=vmem, size = 0x12000, scoped, tag = 'internal scratch']
  %s0 = inlined_call_operand.vmem [shape: bf16[128,128], index: 0, kind: input, shape index: {}]
  %s1 = inlined_call_operand.vmem [shape: f32[1,128], index: 1, kind: input, shape index: {}]
  %s2 = inlined_call_operand.vmem [shape: f32[128,1], index: 2, kind: input, shape index: {}]
  %s3 = inlined_call_operand.vmem [shape: s8[128,128], index: 3, kind: input, shape index: {}]
  %s4 = inlined_call_operand.vmem [shape: f32[128,128], index: 4, kind: output, shape index: {}]
  %s5 = sld [smem:[#allocation0]]
  $region26: #{gcn_forward.7} parent=0
    _
  %s7 = ssub.s32 1, %s5
  %s8 = scalar_select 0, %s7, %s5
  // Predicated region
  $region2: #{gcn_forward.7} parent=0 // pred_check
    _
  $region3: #{gcn_forward.7} parent=0 // pred_check_branch
    %10 = sbr.rel (0) target = $region5
  $region4: #{gcn_forward.7} parent=0 // pred_region
    _
  $region5: #{gcn_forward.7} parent=0 // pred_fallthru
    _
  // Predicated region
  $region6: #{gcn_forward.7} parent=0 // pred_check
    _
  $region7: #{gcn_forward.7} parent=0 // pred_check_branch
    %12 = sbr.rel (0) target = $region9
  $region8: #{gcn_forward.7} parent=0 // pred_region
    _
  $region9: #{gcn_forward.7} parent=0 // pred_fallthru
    _
  // Predicated region
  $region10: #{gcn_forward.7} parent=0 // pred_check
    _
  $region11: #{gcn_forward.7} parent=0 // pred_check_branch
    %14 = sbr.rel (0) target = $region13
  $region12: #{gcn_forward.7} parent=0 // pred_region
    _
  $region13: #{gcn_forward.7} parent=0 // pred_fallthru
    _
  // Predicated region
  $region14: #{gcn_forward.7} parent=0 // pred_check
    _
  $region15: #{gcn_forward.7} parent=0 // pred_check_branch
    %16 = sbr.rel (0) target = $region17
  $region16: #{gcn_forward.7} parent=0 // pred_region
    _
  $region17: #{gcn_forward.7} parent=0 // pred_fallthru
    _
  %v18 = vld [vmem:[%s3] sm:$0xff]
  %v19 = vld [vmem:[%s3 + $0x8] sm:$0xff]
  %v20 = vld [vmem:[%s3 + $0x10] sm:$0xff]
  %v21 = vld [vmem:[%s3 + $0x18] sm:$0xff]
  %v22 = vunpack.c.l.s8.bf16 %v18
  %v23 = vunpack.c.h.s8.bf16 %v18
  %v24 = vunpack.c.l.s8.bf16 %v19
  %v25 = vunpack.c.h.s8.bf16 %v19
  %v26 = vunpack.c.l.s8.bf16 %v20
  %v27 = vunpack.c.h.s8.bf16 %v20
  %v28 = vunpack.c.l.s8.bf16 %v21
  %v29 = vunpack.c.h.s8.bf16 %v21
  %v30 = vld [vmem:[%s0] sm:$0xf]
  %v31 = vld [vmem:[%s0 + $0x4] sm:$0xf]
  %v32 = vld [vmem:[%s0 + $0x8] sm:$0xf]
  %v33 = vld [vmem:[%s0 + $0xc] sm:$0xf]
  %v34 = vld [vmem:[%s0 + $0x10] sm:$0xf]
  %v35 = vld [vmem:[%s0 + $0x14] sm:$0xf]
  %v36 = vld [vmem:[%s0 + $0x18] sm:$0xf]
  %v37 = vld [vmem:[%s0 + $0x1c] sm:$0xf]
  %v38 = vld [vmem:[%s0 + $0x20] sm:$0xf]
  %v39 = vld [vmem:[%s0 + $0x24] sm:$0xf]
  %v40 = vld [vmem:[%s0 + $0x28] sm:$0xf]
  %v41 = vld [vmem:[%s0 + $0x2c] sm:$0xf]
  %v42 = vld [vmem:[%s0 + $0x30] sm:$0xf]
  %v43 = vld [vmem:[%s0 + $0x34] sm:$0xf]
  %v44 = vld [vmem:[%s0 + $0x38] sm:$0xf]
  %v45 = vld [vmem:[%s0 + $0x3c] sm:$0xf]
  %v62 = vunpack.c.l.b16 %v30
  %v63 = vunpack.c.l.b16 %v31
  %v64 = vunpack.c.l.b16 %v32
  %v65 = vunpack.c.l.b16 %v33
  %v66 = vunpack.c.l.b16 %v34
  %v67 = vunpack.c.l.b16 %v35
  %v68 = vunpack.c.l.b16 %v36
  %v69 = vunpack.c.l.b16 %v37
  %v70 = vunpack.c.l.b16 %v38
  %v71 = vunpack.c.l.b16 %v39
  %v72 = vunpack.c.l.b16 %v40
  %v73 = vunpack.c.l.b16 %v41
  %v74 = vunpack.c.l.b16 %v42
  %v75 = vunpack.c.l.b16 %v43
  %v76 = vunpack.c.l.b16 %v44
  %v77 = vunpack.c.l.b16 %v45
  %v78 = vpack.c.b16 %v63, %v62
  %v79 = vpack.c.b16 %v65, %v64
  %v80 = vpack.c.b16 %v67, %v66
  %v81 = vpack.c.b16 %v69, %v68
  %v82 = vpack.c.b16 %v71, %v70
  %v83 = vpack.c.b16 %v73, %v72
  %v84 = vpack.c.b16 %v75, %v74
  %v85 = vpack.c.b16 %v77, %v76
  %94 = vmatprep.subr.bf16.mxu0 0
  %95 = vmatpush1.bf16.msra.mxu0 %v85
  %96 = vmatprep.subr.bf16.mxu0 0
  %97 = vmatpush1.bf16.msra.mxu0 %v84
  %98 = vmatprep.subr.bf16.mxu0 0
  %99 = vmatpush1.bf16.msra.mxu0 %v83
  %100 = vmatprep.subr.bf16.mxu0 0
  %101 = vmatpush1.bf16.msra.mxu0 %v82
  %102 = vmatprep.subr.bf16.mxu0 0
  %103 = vmatpush1.bf16.msra.mxu0 %v81
  %104 = vmatprep.subr.bf16.mxu0 0
  %105 = vmatpush1.bf16.msra.mxu0 %v80
  %106 = vmatprep.subr.bf16.mxu0 0
  %107 = vmatpush1.bf16.msra.mxu0 %v79
  %108 = vmatprep.subr.bf16.mxu0 0
  %109 = vmatpush1.bf16.msra.mxu0 %v78
  %110 = vmatprep.subr.bf16.mxu0 0
  %111 = vmatpush2.bf16.msra.mxu0 0
  %112 = vmatprep.subr.bf16.mxu0 0
  %113 = vmatpush2.bf16.msra.mxu0 0
  %114 = vmatprep.subr.bf16.mxu0 0
  %115 = vmatpush2.bf16.msra.mxu0 0
  %116 = vmatprep.subr.bf16.mxu0 0
  %117 = vmatpush2.bf16.msra.mxu0 0
  %118 = vmatprep.subr.bf16.mxu0 0
  %119 = vmatpush2.bf16.msra.mxu0 0
  %120 = vmatprep.subr.bf16.mxu0 0
  %121 = vmatpush2.bf16.msra.mxu0 0
  %122 = vmatprep.subr.bf16.mxu0 0
  %123 = vmatpush2.bf16.msra.mxu0 0
  %124 = vmatprep.subr.bf16.mxu0 0
  %125 = vmatpush2.bf16.msra.mxu0 0
  %126 = vmatprep.mubr.bf16.mxu0 0
  %127 = vmatmul.mubr.bf16.gmra.mxu0 %v22
  %v128 = vpop.f32.mrf.mxu0
  %v129 = vadd.f32 0.0, %v128
  %v130 = vpop.f32.mrf.mxu0
  %v131 = vpop.f32.mrf.mxu0
  %v132 = vadd.f32 0.0, %v131
  %v133 = vpop.f32.mrf.mxu0
  %134 = vmatprep.mubr.bf16.mxu0 0
  %135 = vmatmul.mubr.bf16.gmra.mxu0 %v23
  %v136 = vpop.f32.mrf.mxu0
  %v137 = vadd.f32 0.0, %v136
  %v138 = vpop.f32.mrf.mxu0
  %v139 = vpop.f32.mrf.mxu0
  %v140 = vadd.f32 0.0, %v139
  %v141 = vpop.f32.mrf.mxu0
  %142 = vmatprep.mubr.bf16.mxu0 0
  %143 = vmatmul.mubr.bf16.gmra.mxu0 %v24
  %v144 = vpop.f32.mrf.mxu0
  %v145 = vadd.f32 0.0, %v144
  %v146 = vpop.f32.mrf.mxu0
  %v147 = vpop.f32.mrf.mxu0
  %v148 = vadd.f32 0.0, %v147
  %v149 = vpop.f32.mrf.mxu0
  %150 = vmatprep.mubr.bf16.mxu0 0
  %151 = vmatmul.mubr.bf16.gmra.mxu0 %v25
  %v152 = vpop.f32.mrf.mxu0
  %v153 = vadd.f32 0.0, %v152
  %v154 = vpop.f32.mrf.mxu0
  %v155 = vpop.f32.mrf.mxu0
  %v156 = vadd.f32 0.0, %v155
  %v157 = vpop.f32.mrf.mxu0
  %158 = vmatprep.mubr.bf16.mxu0 0
  %159 = vmatmul.mubr.bf16.gmra.mxu0 %v26
  %v160 = vpop.f32.mrf.mxu0
  %v161 = vadd.f32 0.0, %v160
  %v162 = vpop.f32.mrf.mxu0
  %v163 = vpop.f32.mrf.mxu0
  %v164 = vadd.f32 0.0, %v163
  %v165 = vpop.f32.mrf.mxu0
  %166 = vmatprep.mubr.bf16.mxu0 0
  %167 = vmatmul.mubr.bf16.gmra.mxu0 %v27
  %v168 = vpop.f32.mrf.mxu0
  %v169 = vadd.f32 0.0, %v168
  %v170 = vpop.f32.mrf.mxu0
  %v171 = vpop.f32.mrf.mxu0
  %v172 = vadd.f32 0.0, %v171
  %v173 = vpop.f32.mrf.mxu0
  %174 = vmatprep.mubr.bf16.mxu0 0
  %175 = vmatmul.mubr.bf16.gmra.mxu0 %v28
  %v176 = vpop.f32.mrf.mxu0
  %v177 = vadd.f32 0.0, %v176
  %v178 = vpop.f32.mrf.mxu0
  %v179 = vpop.f32.mrf.mxu0
  %v180 = vadd.f32 0.0, %v179
  %v181 = vpop.f32.mrf.mxu0
  %182 = vmatprep.mubr.bf16.mxu0 0
  %183 = vmatmul.mubr.bf16.gmra.mxu0 %v29
  %v184 = vpop.f32.mrf.mxu0
  %v185 = vadd.f32 0.0, %v184
  %v186 = vpop.f32.mrf.mxu0
  %v187 = vpop.f32.mrf.mxu0
  %v188 = vadd.f32 0.0, %v187
  %v189 = vpop.f32.mrf.mxu0
  %190 = vdwg.mxu0
  %v191 = vld [vmem:[%s2] sm:$0xff]
  %v192 = vld [vmem:[%s2 + $0x8] sm:$0xff]
  %v193 = vld [vmem:[%s2 + $0x10] sm:$0xff]
  %v194 = vld [vmem:[%s2 + $0x18] sm:$0xff]
  %v195 = vld [vmem:[%s2 + $0x20] sm:$0xff]
  %v196 = vld [vmem:[%s2 + $0x28] sm:$0xff]
  %v197 = vld [vmem:[%s2 + $0x30] sm:$0xff]
  %v198 = vld [vmem:[%s2 + $0x38] sm:$0xff]
  %v199 = vld [vmem:[%s2 + $0x40] sm:$0xff]
  %v200 = vld [vmem:[%s2 + $0x48] sm:$0xff]
  %v201 = vld [vmem:[%s2 + $0x50] sm:$0xff]
  %v202 = vld [vmem:[%s2 + $0x58] sm:$0xff]
  %v203 = vld [vmem:[%s2 + $0x60] sm:$0xff]
  %v204 = vld [vmem:[%s2 + $0x68] sm:$0xff]
  %v205 = vld [vmem:[%s2 + $0x70] sm:$0xff]
  %v206 = vld [vmem:[%s2 + $0x78] sm:$0xff]
  %208 = vset.pattern.permute.xlu0 0
  %209 = vperm.xlu0 %208, %v191
  %v210 = vpop.permute.xlu0 %209
  %213 = vset.pattern.permute.xlu0 0
  %214 = vperm.xlu0 %213, %v192
  %v215 = vpop.permute.xlu0 %214
  %218 = vset.pattern.permute.xlu0 0
  %219 = vperm.xlu0 %218, %v193
  %v220 = vpop.permute.xlu0 %219
  %223 = vset.pattern.permute.xlu0 0
  %224 = vperm.xlu0 %223, %v194
  %v225 = vpop.permute.xlu0 %224
  %228 = vset.pattern.permute.xlu0 0
  %229 = vperm.xlu0 %228, %v195
  %v230 = vpop.permute.xlu0 %229
  %233 = vset.pattern.permute.xlu0 0
  %234 = vperm.xlu0 %233, %v196
  %v235 = vpop.permute.xlu0 %234
  %238 = vset.pattern.permute.xlu0 0
  %239 = vperm.xlu0 %238, %v197
  %v240 = vpop.permute.xlu0 %239
  %243 = vset.pattern.permute.xlu0 0
  %244 = vperm.xlu0 %243, %v198
  %v245 = vpop.permute.xlu0 %244
  %248 = vset.pattern.permute.xlu0 0
  %249 = vperm.xlu0 %248, %v199
  %v250 = vpop.permute.xlu0 %249
  %253 = vset.pattern.permute.xlu0 0
  %254 = vperm.xlu0 %253, %v200
  %v255 = vpop.permute.xlu0 %254
  %258 = vset.pattern.permute.xlu0 0
  %259 = vperm.xlu0 %258, %v201
  %v260 = vpop.permute.xlu0 %259
  %263 = vset.pattern.permute.xlu0 0
  %264 = vperm.xlu0 %263, %v202
  %v265 = vpop.permute.xlu0 %264
  %268 = vset.pattern.permute.xlu0 0
  %269 = vperm.xlu0 %268, %v203
  %v270 = vpop.permute.xlu0 %269
  %273 = vset.pattern.permute.xlu0 0
  %274 = vperm.xlu0 %273, %v204
  %v275 = vpop.permute.xlu0 %274
  %278 = vset.pattern.permute.xlu0 0
  %279 = vperm.xlu0 %278, %v205
  %v280 = vpop.permute.xlu0 %279
  %283 = vset.pattern.permute.xlu0 0
  %284 = vperm.xlu0 %283, %v206
  %v285 = vpop.permute.xlu0 %284
  %v287 = vmul.f32 %v129, %v210
  %v288 = vmul.f32 %v132, %v215
  %v289 = vmul.f32 %v137, %v220
  %v290 = vmul.f32 %v140, %v225
  %v291 = vmul.f32 %v145, %v230
  %v292 = vmul.f32 %v148, %v235
  %v293 = vmul.f32 %v153, %v240
  %v294 = vmul.f32 %v156, %v245
  %v295 = vmul.f32 %v161, %v250
  %v296 = vmul.f32 %v164, %v255
  %v297 = vmul.f32 %v169, %v260
  %v298 = vmul.f32 %v172, %v265
  %v299 = vmul.f32 %v177, %v270
  %v300 = vmul.f32 %v180, %v275
  %v301 = vmul.f32 %v185, %v280
  %v302 = vmul.f32 %v188, %v285
  %v303 = vld [vmem:[%s1] sm:$0x1]
  %v305 = vlaneseq
  %v306 = vshrl.u32 %v305, 7
  %v307 = vsub.s32 0, %v306
  %v308 = vrot.slane %v303, %v307
  %v310 = vadd.f32 %v287, %v308
  %v311 = vadd.f32 %v288, %v308
  %v312 = vadd.f32 %v289, %v308
  %v313 = vadd.f32 %v290, %v308
  %v314 = vadd.f32 %v291, %v308
  %v315 = vadd.f32 %v292, %v308
  %v316 = vadd.f32 %v293, %v308
  %v317 = vadd.f32 %v294, %v308
  %v318 = vadd.f32 %v295, %v308
  %v319 = vadd.f32 %v296, %v308
  %v320 = vadd.f32 %v297, %v308
  %v321 = vadd.f32 %v298, %v308
  %v322 = vadd.f32 %v299, %v308
  %v323 = vadd.f32 %v300, %v308
  %v324 = vadd.f32 %v301, %v308
  %v325 = vadd.f32 %v302, %v308
  %326 = vst [vmem:[%s4] sm:$0xff] %v310
  %327 = vst [vmem:[%s4 + $0x8] sm:$0xff] %v311
  %328 = vst [vmem:[%s4 + $0x10] sm:$0xff] %v312
  %329 = vst [vmem:[%s4 + $0x18] sm:$0xff] %v313
  %330 = vst [vmem:[%s4 + $0x20] sm:$0xff] %v314
  %331 = vst [vmem:[%s4 + $0x28] sm:$0xff] %v315
  %332 = vst [vmem:[%s4 + $0x30] sm:$0xff] %v316
  %333 = vst [vmem:[%s4 + $0x38] sm:$0xff] %v317
  %334 = vst [vmem:[%s4 + $0x40] sm:$0xff] %v318
  %335 = vst [vmem:[%s4 + $0x48] sm:$0xff] %v319
  %336 = vst [vmem:[%s4 + $0x50] sm:$0xff] %v320
  %337 = vst [vmem:[%s4 + $0x58] sm:$0xff] %v321
  %338 = vst [vmem:[%s4 + $0x60] sm:$0xff] %v322
  %339 = vst [vmem:[%s4 + $0x68] sm:$0xff] %v323
  %340 = vst [vmem:[%s4 + $0x70] sm:$0xff] %v324
  %341 = vst [vmem:[%s4 + $0x78] sm:$0xff] %v325
  // Predicated region
  $region18: #{gcn_forward.7} parent=0 // pred_check
    _
  $region19: #{gcn_forward.7} parent=0 // pred_check_branch
    %343 = sbr.rel (0) target = $region21
  $region20: #{gcn_forward.7} parent=0 // pred_region
    _
  $region21: #{gcn_forward.7} parent=0 // pred_fallthru
    _
  // Predicated region
  $region22: #{gcn_forward.7} parent=0 // pred_check
    _
  $region23: #{gcn_forward.7} parent=0 // pred_check_branch
    %345 = sbr.rel (0) target = $region25
  $region24: #{gcn_forward.7} parent=0 // pred_region
    _
  $region25: #{gcn_forward.7} parent=0 // pred_fallthru
    _

</llo_original>
